<compile_context>
chip_gen: v7x
topology: tpu7x:2x2x1
jax: 0.10.0
libtpu: 0.0.40
codegen_flags: <defaults>
</compile_context>

<pallas_src>
import jax
import jax.numpy as jnp
from jax import lax
from jax.experimental import pallas as pl
from jax.experimental.pallas import tpu as pltpu

# OGB-style feature vocab sizes (deterministic, defined in-script).
ATOM_FEATURE_DIMS = [119, 4, 12, 12, 10, 6, 6, 2, 2]   # sum = 173
BOND_FEATURE_DIMS = [5, 6, 2]                           # sum = 13

_SMEM = pl.BlockSpec(memory_space=pltpu.MemorySpace.SMEM)
_VMEM = pl.BlockSpec(memory_space=pltpu.MemorySpace.VMEM)


# --------------------------------------------------------------------------
# Fused kernel: L x ResidualConvLayer(maxminmean) -> LN+ReLU
#               -> concat([global_max_pool, global_mean_pool])
# --------------------------------------------------------------------------
def _deeper_gcn_kernel(
        # SMEM scalar vectors
        src_ref,       # [E]   int32, source node per dst-sorted edge
        seg_ref,       # [N+1] int32, per-node edge-segment offsets
        goff_ref,      # [B+1] int32, per-graph node offsets
        inv_deg_ref,   # [N]   f32, 1/in-degree (0 if isolated)
        inv_cnt_ref,   # [B]   f32, 1/nodes-per-graph
        # VMEM inputs
        h0_ref,        # [N, D]    f32, atom-encoder output
        eemb_ref,      # [L, E, D] f32, per-layer bond embeddings (dst-sorted)
        aw_ref,        # [L, 3D, D] bf16, aggrmlp weight (un-split)
        aggr_b_ref,    # [L, 1, D] f32
        mlp_w_ref,     # [L, D, D] bf16
        mlp_b_ref,     # [L, 1, D] f32
        gamma_ref,     # [L, 1, D] f32
        beta_ref,      # [L, 1, D] f32
        # outputs
        graph_ref,     # [B, 2D] f32
        node_ref,      # [N, D]  f32
        # VMEM scratch
        h_ref,         # [N, D]  f32, node features resident across layers
        agg_ref):      # [N, 3D] f32, max|min|mean per node
    f32 = jnp.float32
    bf16 = jnp.bfloat16
    n, d = h_ref.shape
    b = graph_ref.shape[0]
    num_layers = mlp_w_ref.shape[0]

    h_ref[...] = h0_ref[...]

    def ln_relu(x, g, bta):
        # nn.LayerNorm(D) (eps=1e-5) + ReLU; dropout(eval) = identity.
        mu = jnp.mean(x, axis=-1, keepdims=True)
        xc = x - mu
        var = jnp.mean(xc * xc, axis=-1, keepdims=True)
        return jnp.maximum(xc * lax.rsqrt(var + 1e-5) * g + bta, 0.0)

    def gcn_layer(l):
        """ResidualConvLayer (aggr='maxminmean'); node features read from h_ref."""
        # Dst-sorted segment reduction: per node, reduce its contiguous edge
        # block with register carries (no VMEM RMW), then ONE [1,3D] store.
        def node_body(ni, carry):
            s0 = seg_ref[ni]
            s1 = seg_ref[ni + 1]

            def edge_body(ei, acc):
                mx, mn, sm = acc
                # message(x_j, edge_attr) = x_j + edge_attr
                msg = (h_ref[pl.ds(src_ref[ei], 1), :]
                       + eemb_ref[l, pl.ds(ei, 1), :])
                return (jnp.maximum(mx, msg), jnp.minimum(mn, msg), sm + msg)

            init = (jnp.full((1, d), -jnp.inf, f32),
                    jnp.full((1, d), jnp.inf, f32),
                    jnp.zeros((1, d), f32))
            mx, mn, sm = lax.fori_loop(s0, s1, edge_body, init)

            has = s1 > s0                       # scalar: node has in-edges?
            inv = inv_deg_ref[ni]               # scalar f32 (0 when empty)
            # max | min | mean written side by side -> feeds one K=3D matmul.
            agg_ref[pl.ds(ni, 1), :] = jnp.concatenate(
                [jnp.where(has, mx, 0.0),
                 jnp.where(has, mn, 0.0),
                 sm * inv], axis=-1)
            return carry

        lax.fori_loop(0, n, node_body, 0)

        # aggrmlp(cat([max, min, mean])): one fused bf16 [N,3D]@[3D,D] matmul.
        m = (jnp.dot(agg_ref[...].astype(bf16), aw_ref[l],
                     preferred_element_type=f32) + aggr_b_ref[l])
        hmid = h_ref[...] + m
        return (jnp.dot(hmid.astype(bf16), mlp_w_ref[l],
                        preferred_element_type=f32) + mlp_b_ref[l])

    # Layer 0: no pre-norm, no outer residual (matches DeeperGCN.forward).
    h_ref[...] = gcn_layer(0)

    # Layers 1..L-1: residual -> norms[l] -> relu -> (dropout=id) -> gcns[l] -> +res
    # (spec uses norms[layer] inside the loop and norms[0] at the end).
    for l in range(1, num_layers):
        residual = h_ref[...]
        h_ref[...] = ln_relu(residual, gamma_ref[l], beta_ref[l])
        h_ref[...] = gcn_layer(l) + residual

    # Final norms[0] -> relu -> (dropout=id) = node features.
    node_ref[...] = ln_relu(h_ref[...], gamma_ref[0], beta_ref[0])

    # pool: per-graph contiguous segment reduce over node rows (max & mean).
    def pool_body(g, carry):
        n0 = goff_ref[g]
        n1 = goff_ref[g + 1]

        def nbody(ni, acc):
            mx, sm = acc
            row = node_ref[pl.ds(ni, 1), :]
            return (jnp.maximum(mx, row), sm + row)

        init = (jnp.full((1, d), -jnp.inf, f32), jnp.zeros((1, d), f32))
        mx, sm = lax.fori_loop(n0, n1, nbody, init)
        inv = inv_cnt_ref[g]
        mx = jnp.where(n1 > n0, mx, 0.0)
        graph_ref[pl.ds(g, 1), :] = jnp.concatenate([mx, sm * inv], axis=-1)
        return carry

    lax.fori_loop(0, b, pool_body, 0)


# --------------------------------------------------------------------------
# Wrapper: precomputes encoder lookups, dst-sorted segments, graph offsets
# --------------------------------------------------------------------------
def _exclusive_offsets(dims):
    offs = [0]
    for v in dims[:-1]:
        offs.append(offs[-1] + v)
    return offs


def deeper_gcn_forward(params, x_int, edge_index, edge_attr_int, batch, *,
                       num_graphs):
    n = x_int.shape[0]
    d = params["atom_emb"].shape[1]
    num_layers = params["mlp_w"].shape[0]
    b = num_graphs

    # ---- Atom MulOnehotEncoder as a gather-sum (exact; ~2.7x less DMA than one-hot).
    aoffs = jnp.asarray(_exclusive_offsets(ATOM_FEATURE_DIMS), jnp.int32)
    atom_idx = x_int.astype(jnp.int32) + aoffs[None, :]                     # [N, 9]
    h0 = jnp.take(params["atom_emb"], atom_idx.reshape(-1), axis=0)
    h0 = h0.reshape(n, len(ATOM_FEATURE_DIMS), d).sum(axis=1)               # [N, D]

    # ---- Edges: sort by destination, build per-node segment offsets.
    src = edge_index[0].astype(jnp.int32)
    dst = edge_index[1].astype(jnp.int32)
    e = src.shape[0]
    order = jnp.argsort(dst)
    src_sorted = src[order]
    dst_sorted = dst[order]
    seg_start = jnp.searchsorted(
        dst_sorted, jnp.arange(n + 1, dtype=jnp.int32)).astype(jnp.int32)   # [N+1]
    deg = (seg_start[1:] - seg_start[:-1]).astype(jnp.float32)
    inv_deg = jnp.where(deg > 0, 1.0 / jnp.maximum(deg, 1.0), 0.0)          # [N]

    # ---- All L layers' bond MulOnehotEncoder embeddings, dst-sorted: [L, E, D].
    boffs = jnp.asarray(_exclusive_offsets(BOND_FEATURE_DIMS), jnp.int32)
    bond_idx = (edge_attr_int.astype(jnp.int32) + boffs[None, :])[order]    # [E, 3]
    eemb_all = jnp.take(params["bond_tabs"], bond_idx.reshape(-1), axis=1)
    eemb_all = eemb_all.reshape(num_layers, e, len(BOND_FEATURE_DIMS), d).sum(axis=2)

    # ---- Graph segments (PyG batching => nodes of a graph are contiguous in batch).
    batch_i = batch.astype(jnp.int32)
    goff = jnp.searchsorted(
        batch_i, jnp.arange(b + 1, dtype=jnp.int32)).astype(jnp.int32)      # [B+1]
    cnt = (goff[1:] - goff[:-1]).astype(jnp.float32)
    inv_cnt = jnp.where(cnt > 0, 1.0 / jnp.maximum(cnt, 1.0), 0.0)          # [B]

    # bf16 MXU operands (one-hot selection above stays exact in f32).
    aw_b = params["aggr_w"].astype(jnp.bfloat16)        # [L, 3D, D]
    mlp_w_b = params["mlp_w"].astype(jnp.bfloat16)      # [L, D, D]

    graph_fea, node_fea = pl.pallas_call(
        _deeper_gcn_kernel,
        out_shape=(jax.ShapeDtypeStruct((b, 2 * d), jnp.float32),
                   jax.ShapeDtypeStruct((n, d), jnp.float32)),
        in_specs=[_SMEM] * 5 + [_VMEM] * 8,
        out_specs=(_VMEM, _VMEM),
        scratch_shapes=[
            pltpu.VMEM((n, d), jnp.float32),       # h: resident across layers
            pltpu.VMEM((n, 3 * d), jnp.float32),   # max|min|mean aggregation
        ],
        compiler_params=pltpu.CompilerParams(
            # Above scoped defaults (16/32/32 MiB) yet <= physical on v5e/v6e/v7x.
            vmem_limit_bytes=48 * 1024 * 1024),
    )(src_sorted, seg_start, goff, inv_deg, inv_cnt,
      h0, eemb_all, aw_b, params["aggr_b"], mlp_w_b, params["mlp_b"],
      params["gamma"], params["beta"])
    return graph_fea, node_fea


# --------------------------------------------------------------------------
# Parameter init (deterministic, synthetic — no checkpoint loading)
# --------------------------------------------------------------------------
def _xavier(key, shape):
    fan_in, fan_out = shape[0], shape[1]
    lim = (6.0 / (fan_in + fan_out)) ** 0.5
    return jax.random.uniform(key, shape, jnp.float32, -lim, lim)


def _encoder_table(key, dims, d):
    keys = jax.random.split(key, len(dims))
    return jnp.concatenate([_xavier(k, (v, d)) for k, v in zip(keys, dims)],
                           axis=0)                               # [sum(dims), D]


def init_params(key, embed_dim, num_layers):
    keys = jax.random.split(key, 1 + 3 * num_layers)
    atom_emb = _encoder_table(keys[0], ATOM_FEATURE_DIMS, embed_dim)
    bond_tabs, aggr_w, mlp_w = [], [], []
    for l in range(num_layers):
        k0, k1, k2 = keys[1 + 3 * l: 1 + 3 * (l + 1)]
        bond_tabs.append(_encoder_table(k0, BOND_FEATURE_DIMS, embed_dim))
        aggr_w.append(_xavier(k1, (3 * embed_dim, embed_dim)))   # Linear(3D, D)
        mlp_w.append(_xavier(k2, (embed_dim, embed_dim)))        # Linear(D, D)
    L, D = num_layers, embed_dim
    return {
        "atom_emb": atom_emb,                         # [173, D]
        "bond_tabs": jnp.stack(bond_tabs),            # [L, 13, D]
        "aggr_w": jnp.stack(aggr_w),                  # [L, 3D, D] (kept un-split)
        "aggr_b": jnp.zeros((L, 1, D), jnp.float32),
        "mlp_w": jnp.stack(mlp_w),                    # [L, D, D]
        "mlp_b": jnp.zeros((L, 1, D), jnp.float32),
        "gamma": jnp.ones((L, 1, D), jnp.float32),
        "beta": jnp.zeros((L, 1, D), jnp.float32),
    }


# --------------------------------------------------------------------------
if __name__ == "__main__":
    # args equivalent:
    # {'gnn_number_layer': 3, 'gnn_dropout': 0.1, 'conv_encode_edge': True,
    #  'gnn_embed_dim': 32, 'gnn_aggr': 'maxminmean', 'gnn_norm': 'layer',
    #  'gnn_act': 'relu'}
    EMBED_DIM = 32
    NUM_LAYERS = 3
    NODES_PER_GRAPH = 8
    NUM_GRAPHS = 2
    N = NODES_PER_GRAPH * NUM_GRAPHS

    key = jax.random.PRNGKey(0)
    k_param, k_x, k_e = jax.random.split(key, 3)

    # Bidirectional ring within each graph -> every node has >=1 incoming edge.
    edges = []
    for g in range(NUM_GRAPHS):
        off = g * NODES_PER_GRAPH
        for i in range(NODES_PER_GRAPH):
            j = (i + 1) % NODES_PER_GRAPH
            edges.append((off + i, off + j))
            edges.append((off + j, off + i))
    edge_index = jnp.asarray(edges, dtype=jnp.int32).T           # [2, E], E = 32
    E = edge_index.shape[1]

    xk = jax.random.split(k_x, len(ATOM_FEATURE_DIMS))
    x_int = jnp.stack([jax.random.randint(k, (N,), 0, dmax)
                       for k, dmax in zip(xk, ATOM_FEATURE_DIMS)], axis=1)   # [N, 9]
    ek = jax.random.split(k_e, len(BOND_FEATURE_DIMS))
    edge_attr = jnp.stack([jax.random.randint(k, (E,), 0, dmax)
                           for k, dmax in zip(ek, BOND_FEATURE_DIMS)], axis=1)  # [E, 3]
    batch = jnp.asarray([g for g in range(NUM_GRAPHS)
                         for _ in range(NODES_PER_GRAPH)], dtype=jnp.int32)

    params = init_params(k_param, EMBED_DIM, NUM_LAYERS)

    fwd = jax.jit(deeper_gcn_forward, static_argnames=("num_graphs",))
    graph_fea, node_fea = fwd(params, x_int, edge_index, edge_attr, batch,
                              num_graphs=NUM_GRAPHS)
    jax.block_until_ready((graph_fea, node_fea))

    assert graph_fea.shape == (NUM_GRAPHS, 2 * EMBED_DIM)
    assert node_fea.shape == (N, EMBED_DIM)
    assert bool(jnp.all(jnp.isfinite(graph_fea)))
    assert bool(jnp.all(jnp.isfinite(node_fea)))
    print("KERNEL_OK")
</pallas_src>

<mosaic_0001>
module attributes {stable_mosaic.version = 11 : i64} {
  func.func @_deeper_gcn_kernel(%arg0: memref<32xi32, #tpu.memory_space<smem>>, %arg1: memref<17xi32, #tpu.memory_space<smem>>, %arg2: memref<3xi32, #tpu.memory_space<smem>>, %arg3: memref<16xf32, #tpu.memory_space<smem>>, %arg4: memref<2xf32, #tpu.memory_space<smem>>, %arg5: memref<16x32xf32, #tpu.memory_space<vmem>>, %arg6: memref<3x32x32xf32, #tpu.memory_space<vmem>>, %arg7: memref<3x96x32xbf16, #tpu.memory_space<vmem>>, %arg8: memref<3x1x32xf32, #tpu.memory_space<vmem>>, %arg9: memref<3x32x32xbf16, #tpu.memory_space<vmem>>, %arg10: memref<3x1x32xf32, #tpu.memory_space<vmem>>, %arg11: memref<3x1x32xf32, #tpu.memory_space<vmem>>, %arg12: memref<3x1x32xf32, #tpu.memory_space<vmem>>, %arg13: memref<2x64xf32, #tpu.memory_space<vmem>>, %arg14: memref<16x32xf32, #tpu.memory_space<vmem>>, %arg15: memref<16x32xf32, #tpu.memory_space<vmem>>, %arg16: memref<16x96xf32, #tpu.memory_space<vmem>>) attributes {dimension_semantics = [], scalar_prefetch = 0 : i64, scratch_operands = 2 : i64, tpu.core_type = #tpu.core_type<tc>} {
    %c0 = arith.constant 0 : index
    %c0_0 = arith.constant 0 : index
    %0 = vector.load %arg5[%c0, %c0_0] : memref<16x32xf32, #tpu.memory_space<vmem>>, vector<16x32xf32>
    %c0_1 = arith.constant 0 : index
    %c0_2 = arith.constant 0 : index
    %1 = vector.load %arg15[%c0_1, %c0_2] : memref<16x32xf32, #tpu.memory_space<vmem>>, vector<16x32xf32>
    tpu.vector_store %arg15[%c0_1, %c0_2], %0 {strides = array<i32>} : memref<16x32xf32, #tpu.memory_space<vmem>>, vector<16x32xf32>,
    %c0_i32 = arith.constant 0 : i32
    %c16_i32 = arith.constant 16 : i32
    %2 = arith.addi %c0_i32, %c16_i32 : i32
    %c1_i32 = arith.constant 1 : i32
    scf.for %arg17 = %c0_i32 to %2 step %c1_i32  : i32 {
      %152 = arith.index_cast %arg17 : i32 to index
      %153 = memref.load %arg1[%152] : memref<17xi32, #tpu.memory_space<smem>>
      %c1_i32_120 = arith.constant 1 : i32
      %154 = arith.addi %arg17, %c1_i32_120 : i32
      %155 = arith.index_cast %154 : i32 to index
      %156 = memref.load %arg1[%155] : memref<17xi32, #tpu.memory_space<smem>>
      %cst_121 = arith.constant 0xFF800000 : f32
      %157 = vector.broadcast %cst_121 : f32 to vector<1x32xf32>
      %cst_122 = arith.constant 0x7F800000 : f32
      %158 = vector.broadcast %cst_122 : f32 to vector<1x32xf32>
      %cst_123 = arith.constant 0.000000e+00 : f32
      %159 = vector.broadcast %cst_123 : f32 to vector<1x32xf32>
      %160 = arith.subi %156, %153 : i32
      %161 = arith.addi %153, %160 : i32
      %c1_i32_124 = arith.constant 1 : i32
      %162:3 = scf.for %arg18 = %153 to %161 step %c1_i32_124 iter_args(%arg19 = %157, %arg20 = %158, %arg21 = %159) -> (vector<1x32xf32>, vector<1x32xf32>, vector<1x32xf32>)  : i32 {
        %175 = arith.index_cast %arg18 : i32 to index
        %176 = memref.load %arg0[%175] : memref<32xi32, #tpu.memory_space<smem>>
        %177 = arith.index_cast %176 : i32 to index
        %c0_128 = arith.constant 0 : index
        %178 = vector.load %arg15[%177, %c0_128] : memref<16x32xf32, #tpu.memory_space<vmem>>, vector<1x32xf32>
        %c0_129 = arith.constant 0 : index
        %179 = arith.index_cast %arg18 : i32 to index
        %c0_130 = arith.constant 0 : index
        %180 = vector.load %arg6[%c0_129, %179, %c0_130] : memref<3x32x32xf32, #tpu.memory_space<vmem>>, vector<1x1x32xf32>
        %181 = vector.shape_cast %180 : vector<1x1x32xf32> to vector<1x32xf32>
        %182 = arith.addf %178, %181 : vector<1x32xf32>
        %183 = arith.maximumf %arg19, %182 : vector<1x32xf32>
        %184 = arith.minimumf %arg20, %182 : vector<1x32xf32>
        %185 = arith.addf %arg21, %182 : vector<1x32xf32>
        scf.yield %183, %184, %185 : vector<1x32xf32>, vector<1x32xf32>, vector<1x32xf32>
      }
      %163 = arith.cmpi sgt, %156, %153 : i32
      %164 = arith.index_cast %arg17 : i32 to index
      %165 = memref.load %arg3[%164] : memref<16xf32, #tpu.memory_space<smem>>
      %cst_125 = arith.constant 0.000000e+00 : f32
      %166 = vector.broadcast %cst_125 : f32 to vector<1x32xf32>
      %167 = arith.select %163, %162#0, %166 : vector<1x32xf32>
      %cst_126 = arith.constant 0.000000e+00 : f32
      %168 = vector.broadcast %cst_126 : f32 to vector<1x32xf32>
      %169 = arith.select %163, %162#1, %168 : vector<1x32xf32>
      %170 = vector.broadcast %165 : f32 to vector<1x32xf32>
      %171 = arith.mulf %162#2, %170 : vector<1x32xf32>
      %172 = tpu.concatenate %167, %169, %171 in 1 : vector<1x32xf32>, vector<1x32xf32>, vector<1x32xf32> -> vector<1x96xf32>
      %173 = arith.index_cast %arg17 : i32 to index
      %c0_127 = arith.constant 0 : index
      %174 = vector.load %arg16[%173, %c0_127] : memref<16x96xf32, #tpu.memory_space<vmem>>, vector<1x96xf32>
      tpu.vector_store %arg16[%173, %c0_127], %172 {strides = array<i32>} : memref<16x96xf32, #tpu.memory_space<vmem>>, vector<1x96xf32>,
    }
    %c16_i32_3 = arith.constant 16 : i32
    %c0_4 = arith.constant 0 : index
    %c0_5 = arith.constant 0 : index
    %3 = vector.load %arg16[%c0_4, %c0_5] : memref<16x96xf32, #tpu.memory_space<vmem>>, vector<16x96xf32>
    %4 = arith.truncf %3 : vector<16x96xf32> to vector<16x96xbf16>
    %c0_6 = arith.constant 0 : index
    %c0_7 = arith.constant 0 : index
    %c0_8 = arith.constant 0 : index
    %5 = vector.load %arg7[%c0_6, %c0_7, %c0_8] : memref<3x96x32xbf16, #tpu.memory_space<vmem>>, vector<1x96x32xbf16>
    %6 = vector.shape_cast %5 : vector<1x96x32xbf16> to vector<96x32xbf16>
    %cst = arith.constant dense<0.000000e+00> : vector<16x32xf32>
    %7 = tpu.matmul %4, %6, %cst {dimension_numbers = #tpu.dot_dimension_numbers<[1], [0], [0], [1], [0, 0, 1, 1], [], []>} : vector<16x96xbf16>, vector<96x32xbf16>, vector<16x32xf32> -> vector<16x32xf32>
    %c0_9 = arith.constant 0 : index
    %c0_10 = arith.constant 0 : index
    %c0_11 = arith.constant 0 : index
    %8 = vector.load %arg8[%c0_9, %c0_10, %c0_11] : memref<3x1x32xf32, #tpu.memory_space<vmem>>, vector<1x1x32xf32>
    %9 = vector.shape_cast %8 : vector<1x1x32xf32> to vector<1x32xf32>
    %10 = vector.broadcast %9 : vector<1x32xf32> to vector<16x32xf32>
    %11 = arith.addf %7, %10 : vector<16x32xf32>
    %c0_12 = arith.constant 0 : index
    %c0_13 = arith.constant 0 : index
    %12 = vector.load %arg15[%c0_12, %c0_13] : memref<16x32xf32, #tpu.memory_space<vmem>>, vector<16x32xf32>
    %13 = arith.addf %12, %11 : vector<16x32xf32>
    %14 = arith.truncf %13 : vector<16x32xf32> to vector<16x32xbf16>
    %c0_14 = arith.constant 0 : index
    %c0_15 = arith.constant 0 : index
    %c0_16 = arith.constant 0 : index
    %15 = vector.load %arg9[%c0_14, %c0_15, %c0_16] : memref<3x32x32xbf16, #tpu.memory_space<vmem>>, vector<1x32x32xbf16>
    %16 = vector.shape_cast %15 : vector<1x32x32xbf16> to vector<32x32xbf16>
    %cst_17 = arith.constant dense<0.000000e+00> : vector<16x32xf32>
    %17 = tpu.matmul %14, %16, %cst_17 {dimension_numbers = #tpu.dot_dimension_numbers<[1], [0], [0], [1], [0, 0, 1, 1], [], []>} : vector<16x32xbf16>, vector<32x32xbf16>, vector<16x32xf32> -> vector<16x32xf32>
    %c0_18 = arith.constant 0 : index
    %c0_19 = arith.constant 0 : index
    %c0_20 = arith.constant 0 : index
    %18 = vector.load %arg10[%c0_18, %c0_19, %c0_20] : memref<3x1x32xf32, #tpu.memory_space<vmem>>, vector<1x1x32xf32>
    %19 = vector.shape_cast %18 : vector<1x1x32xf32> to vector<1x32xf32>
    %20 = vector.broadcast %19 : vector<1x32xf32> to vector<16x32xf32>
    %21 = arith.addf %17, %20 : vector<16x32xf32>
    %c0_21 = arith.constant 0 : index
    %c0_22 = arith.constant 0 : index
    %22 = vector.load %arg15[%c0_21, %c0_22] : memref<16x32xf32, #tpu.memory_space<vmem>>, vector<16x32xf32>
    tpu.vector_store %arg15[%c0_21, %c0_22], %21 {strides = array<i32>} : memref<16x32xf32, #tpu.memory_space<vmem>>, vector<16x32xf32>,
    %c0_23 = arith.constant 0 : index
    %c0_24 = arith.constant 0 : index
    %23 = vector.load %arg15[%c0_23, %c0_24] : memref<16x32xf32, #tpu.memory_space<vmem>>, vector<16x32xf32>
    %c1 = arith.constant 1 : index
    %c0_25 = arith.constant 0 : index
    %c0_26 = arith.constant 0 : index
    %24 = vector.load %arg11[%c1, %c0_25, %c0_26] : memref<3x1x32xf32, #tpu.memory_space<vmem>>, vector<1x1x32xf32>
    %25 = vector.shape_cast %24 : vector<1x1x32xf32> to vector<1x32xf32>
    %c1_27 = arith.constant 1 : index
    %c0_28 = arith.constant 0 : index
    %c0_29 = arith.constant 0 : index
    %26 = vector.load %arg12[%c1_27, %c0_28, %c0_29] : memref<3x1x32xf32, #tpu.memory_space<vmem>>, vector<1x1x32xf32>
    %27 = vector.shape_cast %26 : vector<1x1x32xf32> to vector<1x32xf32>
    %cst_30 = arith.constant dense<0.000000e+00> : vector<16xf32>
    %28 = vector.multi_reduction <add>, %23, %cst_30 [1] : vector<16x32xf32> to vector<16xf32>
    %29 = vector.shape_cast %28 : vector<16xf32> to vector<16x1xf32>
    %cst_31 = arith.constant 3.200000e+01 : f32
    %30 = vector.broadcast %cst_31 : f32 to vector<16x1xf32>
    %31 = arith.divf %29, %30 : vector<16x1xf32>
    %32 = vector.broadcast %31 : vector<16x1xf32> to vector<16x32xf32>
    %33 = arith.subf %23, %32 : vector<16x32xf32>
    %34 = arith.mulf %33, %33 : vector<16x32xf32>
    %cst_32 = arith.constant dense<0.000000e+00> : vector<16xf32>
    %35 = vector.multi_reduction <add>, %34, %cst_32 [1] : vector<16x32xf32> to vector<16xf32>
    %36 = vector.shape_cast %35 : vector<16xf32> to vector<16x1xf32>
    %cst_33 = arith.constant 3.200000e+01 : f32
    %37 = vector.broadcast %cst_33 : f32 to vector<16x1xf32>
    %38 = arith.divf %36, %37 : vector<16x1xf32>
    %cst_34 = arith.constant 9.99999974E-6 : f32
    %39 = vector.broadcast %cst_34 : f32 to vector<16x1xf32>
    %40 = arith.addf %38, %39 : vector<16x1xf32>
    %41 = math.rsqrt %40 : vector<16x1xf32>
    %42 = vector.broadcast %41 : vector<16x1xf32> to vector<16x32xf32>
    %43 = arith.mulf %33, %42 : vector<16x32xf32>
    %44 = vector.broadcast %25 : vector<1x32xf32> to vector<16x32xf32>
    %45 = arith.mulf %43, %44 : vector<16x32xf32>
    %46 = vector.broadcast %27 : vector<1x32xf32> to vector<16x32xf32>
    %47 = arith.addf %45, %46 : vector<16x32xf32>
    %cst_35 = arith.constant 0.000000e+00 : f32
    %48 = vector.broadcast %cst_35 : f32 to vector<16x32xf32>
    %49 = arith.maximumf %47, %48 : vector<16x32xf32>
    %c0_36 = arith.constant 0 : index
    %c0_37 = arith.constant 0 : index
    %50 = vector.load %arg15[%c0_36, %c0_37] : memref<16x32xf32, #tpu.memory_space<vmem>>, vector<16x32xf32>
    tpu.vector_store %arg15[%c0_36, %c0_37], %49 {strides = array<i32>} : memref<16x32xf32, #tpu.memory_space<vmem>>, vector<16x32xf32>,
    %c0_i32_38 = arith.constant 0 : i32
    %c16_i32_39 = arith.constant 16 : i32
    %51 = arith.addi %c0_i32_38, %c16_i32_39 : i32
    %c1_i32_40 = arith.constant 1 : i32
    scf.for %arg17 = %c0_i32_38 to %51 step %c1_i32_40  : i32 {
      %152 = arith.index_cast %arg17 : i32 to index
      %153 = memref.load %arg1[%152] : memref<17xi32, #tpu.memory_space<smem>>
      %c1_i32_120 = arith.constant 1 : i32
      %154 = arith.addi %arg17, %c1_i32_120 : i32
      %155 = arith.index_cast %154 : i32 to index
      %156 = memref.load %arg1[%155] : memref<17xi32, #tpu.memory_space<smem>>
      %cst_121 = arith.constant 0xFF800000 : f32
      %157 = vector.broadcast %cst_121 : f32 to vector<1x32xf32>
      %cst_122 = arith.constant 0x7F800000 : f32
      %158 = vector.broadcast %cst_122 : f32 to vector<1x32xf32>
      %cst_123 = arith.constant 0.000000e+00 : f32
      %159 = vector.broadcast %cst_123 : f32 to vector<1x32xf32>
      %160 = arith.subi %156, %153 : i32
      %161 = arith.addi %153, %160 : i32
      %c1_i32_124 = arith.constant 1 : i32
      %162:3 = scf.for %arg18 = %153 to %161 step %c1_i32_124 iter_args(%arg19 = %157, %arg20 = %158, %arg21 = %159) -> (vector<1x32xf32>, vector<1x32xf32>, vector<1x32xf32>)  : i32 {
        %175 = arith.index_cast %arg18 : i32 to index
        %176 = memref.load %arg0[%175] : memref<32xi32, #tpu.memory_space<smem>>
        %177 = arith.index_cast %176 : i32 to index
        %c0_128 = arith.constant 0 : index
        %178 = vector.load %arg15[%177, %c0_128] : memref<16x32xf32, #tpu.memory_space<vmem>>, vector<1x32xf32>
        %c1_129 = arith.constant 1 : index
        %179 = arith.index_cast %arg18 : i32 to index
        %c0_130 = arith.constant 0 : index
        %180 = vector.load %arg6[%c1_129, %179, %c0_130] : memref<3x32x32xf32, #tpu.memory_space<vmem>>, vector<1x1x32xf32>
        %181 = vector.shape_cast %180 : vector<1x1x32xf32> to vector<1x32xf32>
        %182 = arith.addf %178, %181 : vector<1x32xf32>
        %183 = arith.maximumf %arg19, %182 : vector<1x32xf32>
        %184 = arith.minimumf %arg20, %182 : vector<1x32xf32>
        %185 = arith.addf %arg21, %182 : vector<1x32xf32>
        scf.yield %183, %184, %185 : vector<1x32xf32>, vector<1x32xf32>, vector<1x32xf32>
      }
      %163 = arith.cmpi sgt, %156, %153 : i32
      %164 = arith.index_cast %arg17 : i32 to index
      %165 = memref.load %arg3[%164] : memref<16xf32, #tpu.memory_space<smem>>
      %cst_125 = arith.constant 0.000000e+00 : f32
      %166 = vector.broadcast %cst_125 : f32 to vector<1x32xf32>
      %167 = arith.select %163, %162#0, %166 : vector<1x32xf32>
      %cst_126 = arith.constant 0.000000e+00 : f32
      %168 = vector.broadcast %cst_126 : f32 to vector<1x32xf32>
      %169 = arith.select %163, %162#1, %168 : vector<1x32xf32>
      %170 = vector.broadcast %165 : f32 to vector<1x32xf32>
      %171 = arith.mulf %162#2, %170 : vector<1x32xf32>
      %172 = tpu.concatenate %167, %169, %171 in 1 : vector<1x32xf32>, vector<1x32xf32>, vector<1x32xf32> -> vector<1x96xf32>
      %173 = arith.index_cast %arg17 : i32 to index
      %c0_127 = arith.constant 0 : index
      %174 = vector.load %arg16[%173, %c0_127] : memref<16x96xf32, #tpu.memory_space<vmem>>, vector<1x96xf32>
      tpu.vector_store %arg16[%173, %c0_127], %172 {strides = array<i32>} : memref<16x96xf32, #tpu.memory_space<vmem>>, vector<1x96xf32>,
    }
    %c16_i32_41 = arith.constant 16 : i32
    %c0_42 = arith.constant 0 : index
    %c0_43 = arith.constant 0 : index
    %52 = vector.load %arg16[%c0_42, %c0_43] : memref<16x96xf32, #tpu.memory_space<vmem>>, vector<16x96xf32>
    %53 = arith.truncf %52 : vector<16x96xf32> to vector<16x96xbf16>
    %c1_44 = arith.constant 1 : index
    %c0_45 = arith.constant 0 : index
    %c0_46 = arith.constant 0 : index
    %54 = vector.load %arg7[%c1_44, %c0_45, %c0_46] : memref<3x96x32xbf16, #tpu.memory_space<vmem>>, vector<1x96x32xbf16>
    %55 = vector.shape_cast %54 : vector<1x96x32xbf16> to vector<96x32xbf16>
    %cst_47 = arith.constant dense<0.000000e+00> : vector<16x32xf32>
    %56 = tpu.matmul %53, %55, %cst_47 {dimension_numbers = #tpu.dot_dimension_numbers<[1], [0], [0], [1], [0, 0, 1, 1], [], []>} : vector<16x96xbf16>, vector<96x32xbf16>, vector<16x32xf32> -> vector<16x32xf32>
    %c1_48 = arith.constant 1 : index
    %c0_49 = arith.constant 0 : index
    %c0_50 = arith.constant 0 : index
    %57 = vector.load %arg8[%c1_48, %c0_49, %c0_50] : memref<3x1x32xf32, #tpu.memory_space<vmem>>, vector<1x1x32xf32>
    %58 = vector.shape_cast %57 : vector<1x1x32xf32> to vector<1x32xf32>
    %59 = vector.broadcast %58 : vector<1x32xf32> to vector<16x32xf32>
    %60 = arith.addf %56, %59 : vector<16x32xf32>
    %c0_51 = arith.constant 0 : index
    %c0_52 = arith.constant 0 : index
    %61 = vector.load %arg15[%c0_51, %c0_52] : memref<16x32xf32, #tpu.memory_space<vmem>>, vector<16x32xf32>
    %62 = arith.addf %61, %60 : vector<16x32xf32>
    %63 = arith.truncf %62 : vector<16x32xf32> to vector<16x32xbf16>
    %c1_53 = arith.constant 1 : index
    %c0_54 = arith.constant 0 : index
    %c0_55 = arith.constant 0 : index
    %64 = vector.load %arg9[%c1_53, %c0_54, %c0_55] : memref<3x32x32xbf16, #tpu.memory_space<vmem>>, vector<1x32x32xbf16>
    %65 = vector.shape_cast %64 : vector<1x32x32xbf16> to vector<32x32xbf16>
    %cst_56 = arith.constant dense<0.000000e+00> : vector<16x32xf32>
    %66 = tpu.matmul %63, %65, %cst_56 {dimension_numbers = #tpu.dot_dimension_numbers<[1], [0], [0], [1], [0, 0, 1, 1], [], []>} : vector<16x32xbf16>, vector<32x32xbf16>, vector<16x32xf32> -> vector<16x32xf32>
    %c1_57 = arith.constant 1 : index
    %c0_58 = arith.constant 0 : index
    %c0_59 = arith.constant 0 : index
    %67 = vector.load %arg10[%c1_57, %c0_58, %c0_59] : memref<3x1x32xf32, #tpu.memory_space<vmem>>, vector<1x1x32xf32>
    %68 = vector.shape_cast %67 : vector<1x1x32xf32> to vector<1x32xf32>
    %69 = vector.broadcast %68 : vector<1x32xf32> to vector<16x32xf32>
    %70 = arith.addf %66, %69 : vector<16x32xf32>
    %71 = arith.addf %70, %23 : vector<16x32xf32>
    %c0_60 = arith.constant 0 : index
    %c0_61 = arith.constant 0 : index
    %72 = vector.load %arg15[%c0_60, %c0_61] : memref<16x32xf32, #tpu.memory_space<vmem>>, vector<16x32xf32>
    tpu.vector_store %arg15[%c0_60, %c0_61], %71 {strides = array<i32>} : memref<16x32xf32, #tpu.memory_space<vmem>>, vector<16x32xf32>,
    %c0_62 = arith.constant 0 : index
    %c0_63 = arith.constant 0 : index
    %73 = vector.load %arg15[%c0_62, %c0_63] : memref<16x32xf32, #tpu.memory_space<vmem>>, vector<16x32xf32>
    %c2 = arith.constant 2 : index
    %c0_64 = arith.constant 0 : index
    %c0_65 = arith.constant 0 : index
    %74 = vector.load %arg11[%c2, %c0_64, %c0_65] : memref<3x1x32xf32, #tpu.memory_space<vmem>>, vector<1x1x32xf32>
    %75 = vector.shape_cast %74 : vector<1x1x32xf32> to vector<1x32xf32>
    %c2_66 = arith.constant 2 : index
    %c0_67 = arith.constant 0 : index
    %c0_68 = arith.constant 0 : index
    %76 = vector.load %arg12[%c2_66, %c0_67, %c0_68] : memref<3x1x32xf32, #tpu.memory_space<vmem>>, vector<1x1x32xf32>
    %77 = vector.shape_cast %76 : vector<1x1x32xf32> to vector<1x32xf32>
    %cst_69 = arith.constant dense<0.000000e+00> : vector<16xf32>
    %78 = vector.multi_reduction <add>, %73, %cst_69 [1] : vector<16x32xf32> to vector<16xf32>
    %79 = vector.shape_cast %78 : vector<16xf32> to vector<16x1xf32>
    %cst_70 = arith.constant 3.200000e+01 : f32
    %80 = vector.broadcast %cst_70 : f32 to vector<16x1xf32>
    %81 = arith.divf %79, %80 : vector<16x1xf32>
    %82 = vector.broadcast %81 : vector<16x1xf32> to vector<16x32xf32>
    %83 = arith.subf %73, %82 : vector<16x32xf32>
    %84 = arith.mulf %83, %83 : vector<16x32xf32>
    %cst_71 = arith.constant dense<0.000000e+00> : vector<16xf32>
    %85 = vector.multi_reduction <add>, %84, %cst_71 [1] : vector<16x32xf32> to vector<16xf32>
    %86 = vector.shape_cast %85 : vector<16xf32> to vector<16x1xf32>
    %cst_72 = arith.constant 3.200000e+01 : f32
    %87 = vector.broadcast %cst_72 : f32 to vector<16x1xf32>
    %88 = arith.divf %86, %87 : vector<16x1xf32>
    %cst_73 = arith.constant 9.99999974E-6 : f32
    %89 = vector.broadcast %cst_73 : f32 to vector<16x1xf32>
    %90 = arith.addf %88, %89 : vector<16x1xf32>
    %91 = math.rsqrt %90 : vector<16x1xf32>
    %92 = vector.broadcast %91 : vector<16x1xf32> to vector<16x32xf32>
    %93 = arith.mulf %83, %92 : vector<16x32xf32>
    %94 = vector.broadcast %75 : vector<1x32xf32> to vector<16x32xf32>
    %95 = arith.mulf %93, %94 : vector<16x32xf32>
    %96 = vector.broadcast %77 : vector<1x32xf32> to vector<16x32xf32>
    %97 = arith.addf %95, %96 : vector<16x32xf32>
    %cst_74 = arith.constant 0.000000e+00 : f32
    %98 = vector.broadcast %cst_74 : f32 to vector<16x32xf32>
    %99 = arith.maximumf %97, %98 : vector<16x32xf32>
    %c0_75 = arith.constant 0 : index
    %c0_76 = arith.constant 0 : index
    %100 = vector.load %arg15[%c0_75, %c0_76] : memref<16x32xf32, #tpu.memory_space<vmem>>, vector<16x32xf32>
    tpu.vector_store %arg15[%c0_75, %c0_76], %99 {strides = array<i32>} : memref<16x32xf32, #tpu.memory_space<vmem>>, vector<16x32xf32>,
    %c0_i32_77 = arith.constant 0 : i32
    %c16_i32_78 = arith.constant 16 : i32
    %101 = arith.addi %c0_i32_77, %c16_i32_78 : i32
    %c1_i32_79 = arith.constant 1 : i32
    scf.for %arg17 = %c0_i32_77 to %101 step %c1_i32_79  : i32 {
      %152 = arith.index_cast %arg17 : i32 to index
      %153 = memref.load %arg1[%152] : memref<17xi32, #tpu.memory_space<smem>>
      %c1_i32_120 = arith.constant 1 : i32
      %154 = arith.addi %arg17, %c1_i32_120 : i32
      %155 = arith.index_cast %154 : i32 to index
      %156 = memref.load %arg1[%155] : memref<17xi32, #tpu.memory_space<smem>>
      %cst_121 = arith.constant 0xFF800000 : f32
      %157 = vector.broadcast %cst_121 : f32 to vector<1x32xf32>
      %cst_122 = arith.constant 0x7F800000 : f32
      %158 = vector.broadcast %cst_122 : f32 to vector<1x32xf32>
      %cst_123 = arith.constant 0.000000e+00 : f32
      %159 = vector.broadcast %cst_123 : f32 to vector<1x32xf32>
      %160 = arith.subi %156, %153 : i32
      %161 = arith.addi %153, %160 : i32
      %c1_i32_124 = arith.constant 1 : i32
      %162:3 = scf.for %arg18 = %153 to %161 step %c1_i32_124 iter_args(%arg19 = %157, %arg20 = %158, %arg21 = %159) -> (vector<1x32xf32>, vector<1x32xf32>, vector<1x32xf32>)  : i32 {
        %175 = arith.index_cast %arg18 : i32 to index
        %176 = memref.load %arg0[%175] : memref<32xi32, #tpu.memory_space<smem>>
        %177 = arith.index_cast %176 : i32 to index
        %c0_128 = arith.constant 0 : index
        %178 = vector.load %arg15[%177, %c0_128] : memref<16x32xf32, #tpu.memory_space<vmem>>, vector<1x32xf32>
        %c2_129 = arith.constant 2 : index
        %179 = arith.index_cast %arg18 : i32 to index
        %c0_130 = arith.constant 0 : index
        %180 = vector.load %arg6[%c2_129, %179, %c0_130] : memref<3x32x32xf32, #tpu.memory_space<vmem>>, vector<1x1x32xf32>
        %181 = vector.shape_cast %180 : vector<1x1x32xf32> to vector<1x32xf32>
        %182 = arith.addf %178, %181 : vector<1x32xf32>
        %183 = arith.maximumf %arg19, %182 : vector<1x32xf32>
        %184 = arith.minimumf %arg20, %182 : vector<1x32xf32>
        %185 = arith.addf %arg21, %182 : vector<1x32xf32>
        scf.yield %183, %184, %185 : vector<1x32xf32>, vector<1x32xf32>, vector<1x32xf32>
      }
      %163 = arith.cmpi sgt, %156, %153 : i32
      %164 = arith.index_cast %arg17 : i32 to index
      %165 = memref.load %arg3[%164] : memref<16xf32, #tpu.memory_space<smem>>
      %cst_125 = arith.constant 0.000000e+00 : f32
      %166 = vector.broadcast %cst_125 : f32 to vector<1x32xf32>
      %167 = arith.select %163, %162#0, %166 : vector<1x32xf32>
      %cst_126 = arith.constant 0.000000e+00 : f32
      %168 = vector.broadcast %cst_126 : f32 to vector<1x32xf32>
      %169 = arith.select %163, %162#1, %168 : vector<1x32xf32>
      %170 = vector.broadcast %165 : f32 to vector<1x32xf32>
      %171 = arith.mulf %162#2, %170 : vector<1x32xf32>
      %172 = tpu.concatenate %167, %169, %171 in 1 : vector<1x32xf32>, vector<1x32xf32>, vector<1x32xf32> -> vector<1x96xf32>
      %173 = arith.index_cast %arg17 : i32 to index
      %c0_127 = arith.constant 0 : index
      %174 = vector.load %arg16[%173, %c0_127] : memref<16x96xf32, #tpu.memory_space<vmem>>, vector<1x96xf32>
      tpu.vector_store %arg16[%173, %c0_127], %172 {strides = array<i32>} : memref<16x96xf32, #tpu.memory_space<vmem>>, vector<1x96xf32>,
    }
    %c16_i32_80 = arith.constant 16 : i32
    %c0_81 = arith.constant 0 : index
    %c0_82 = arith.constant 0 : index
    %102 = vector.load %arg16[%c0_81, %c0_82] : memref<16x96xf32, #tpu.memory_space<vmem>>, vector<16x96xf32>
    %103 = arith.truncf %102 : vector<16x96xf32> to vector<16x96xbf16>
    %c2_83 = arith.constant 2 : index
    %c0_84 = arith.constant 0 : index
    %c0_85 = arith.constant 0 : index
    %104 = vector.load %arg7[%c2_83, %c0_84, %c0_85] : memref<3x96x32xbf16, #tpu.memory_space<vmem>>, vector<1x96x32xbf16>
    %105 = vector.shape_cast %104 : vector<1x96x32xbf16> to vector<96x32xbf16>
    %cst_86 = arith.constant dense<0.000000e+00> : vector<16x32xf32>
    %106 = tpu.matmul %103, %105, %cst_86 {dimension_numbers = #tpu.dot_dimension_numbers<[1], [0], [0], [1], [0, 0, 1, 1], [], []>} : vector<16x96xbf16>, vector<96x32xbf16>, vector<16x32xf32> -> vector<16x32xf32>
    %c2_87 = arith.constant 2 : index
    %c0_88 = arith.constant 0 : index
    %c0_89 = arith.constant 0 : index
    %107 = vector.load %arg8[%c2_87, %c0_88, %c0_89] : memref<3x1x32xf32, #tpu.memory_space<vmem>>, vector<1x1x32xf32>
    %108 = vector.shape_cast %107 : vector<1x1x32xf32> to vector<1x32xf32>
    %109 = vector.broadcast %108 : vector<1x32xf32> to vector<16x32xf32>
    %110 = arith.addf %106, %109 : vector<16x32xf32>
    %c0_90 = arith.constant 0 : index
    %c0_91 = arith.constant 0 : index
    %111 = vector.load %arg15[%c0_90, %c0_91] : memref<16x32xf32, #tpu.memory_space<vmem>>, vector<16x32xf32>
    %112 = arith.addf %111, %110 : vector<16x32xf32>
    %113 = arith.truncf %112 : vector<16x32xf32> to vector<16x32xbf16>
    %c2_92 = arith.constant 2 : index
    %c0_93 = arith.constant 0 : index
    %c0_94 = arith.constant 0 : index
    %114 = vector.load %arg9[%c2_92, %c0_93, %c0_94] : memref<3x32x32xbf16, #tpu.memory_space<vmem>>, vector<1x32x32xbf16>
    %115 = vector.shape_cast %114 : vector<1x32x32xbf16> to vector<32x32xbf16>
    %cst_95 = arith.constant dense<0.000000e+00> : vector<16x32xf32>
    %116 = tpu.matmul %113, %115, %cst_95 {dimension_numbers = #tpu.dot_dimension_numbers<[1], [0], [0], [1], [0, 0, 1, 1], [], []>} : vector<16x32xbf16>, vector<32x32xbf16>, vector<16x32xf32> -> vector<16x32xf32>
    %c2_96 = arith.constant 2 : index
    %c0_97 = arith.constant 0 : index
    %c0_98 = arith.constant 0 : index
    %117 = vector.load %arg10[%c2_96, %c0_97, %c0_98] : memref<3x1x32xf32, #tpu.memory_space<vmem>>, vector<1x1x32xf32>
    %118 = vector.shape_cast %117 : vector<1x1x32xf32> to vector<1x32xf32>
    %119 = vector.broadcast %118 : vector<1x32xf32> to vector<16x32xf32>
    %120 = arith.addf %116, %119 : vector<16x32xf32>
    %121 = arith.addf %120, %73 : vector<16x32xf32>
    %c0_99 = arith.constant 0 : index
    %c0_100 = arith.constant 0 : index
    %122 = vector.load %arg15[%c0_99, %c0_100] : memref<16x32xf32, #tpu.memory_space<vmem>>, vector<16x32xf32>
    tpu.vector_store %arg15[%c0_99, %c0_100], %121 {strides = array<i32>} : memref<16x32xf32, #tpu.memory_space<vmem>>, vector<16x32xf32>,
    %c0_101 = arith.constant 0 : index
    %c0_102 = arith.constant 0 : index
    %123 = vector.load %arg15[%c0_101, %c0_102] : memref<16x32xf32, #tpu.memory_space<vmem>>, vector<16x32xf32>
    %c0_103 = arith.constant 0 : index
    %c0_104 = arith.constant 0 : index
    %c0_105 = arith.constant 0 : index
    %124 = vector.load %arg11[%c0_103, %c0_104, %c0_105] : memref<3x1x32xf32, #tpu.memory_space<vmem>>, vector<1x1x32xf32>
    %125 = vector.shape_cast %124 : vector<1x1x32xf32> to vector<1x32xf32>
    %c0_106 = arith.constant 0 : index
    %c0_107 = arith.constant 0 : index
    %c0_108 = arith.constant 0 : index
    %126 = vector.load %arg12[%c0_106, %c0_107, %c0_108] : memref<3x1x32xf32, #tpu.memory_space<vmem>>, vector<1x1x32xf32>
    %127 = vector.shape_cast %126 : vector<1x1x32xf32> to vector<1x32xf32>
    %cst_109 = arith.constant dense<0.000000e+00> : vector<16xf32>
    %128 = vector.multi_reduction <add>, %123, %cst_109 [1] : vector<16x32xf32> to vector<16xf32>
    %129 = vector.shape_cast %128 : vector<16xf32> to vector<16x1xf32>
    %cst_110 = arith.constant 3.200000e+01 : f32
    %130 = vector.broadcast %cst_110 : f32 to vector<16x1xf32>
    %131 = arith.divf %129, %130 : vector<16x1xf32>
    %132 = vector.broadcast %131 : vector<16x1xf32> to vector<16x32xf32>
    %133 = arith.subf %123, %132 : vector<16x32xf32>
    %134 = arith.mulf %133, %133 : vector<16x32xf32>
    %cst_111 = arith.constant dense<0.000000e+00> : vector<16xf32>
    %135 = vector.multi_reduction <add>, %134, %cst_111 [1] : vector<16x32xf32> to vector<16xf32>
    %136 = vector.shape_cast %135 : vector<16xf32> to vector<16x1xf32>
    %cst_112 = arith.constant 3.200000e+01 : f32
    %137 = vector.broadcast %cst_112 : f32 to vector<16x1xf32>
    %138 = arith.divf %136, %137 : vector<16x1xf32>
    %cst_113 = arith.constant 9.99999974E-6 : f32
    %139 = vector.broadcast %cst_113 : f32 to vector<16x1xf32>
    %140 = arith.addf %138, %139 : vector<16x1xf32>
    %141 = math.rsqrt %140 : vector<16x1xf32>
    %142 = vector.broadcast %141 : vector<16x1xf32> to vector<16x32xf32>
    %143 = arith.mulf %133, %142 : vector<16x32xf32>
    %144 = vector.broadcast %125 : vector<1x32xf32> to vector<16x32xf32>
    %145 = arith.mulf %143, %144 : vector<16x32xf32>
    %146 = vector.broadcast %127 : vector<1x32xf32> to vector<16x32xf32>
    %147 = arith.addf %145, %146 : vector<16x32xf32>
    %cst_114 = arith.constant 0.000000e+00 : f32
    %148 = vector.broadcast %cst_114 : f32 to vector<16x32xf32>
    %149 = arith.maximumf %147, %148 : vector<16x32xf32>
    %c0_115 = arith.constant 0 : index
    %c0_116 = arith.constant 0 : index
    %150 = vector.load %arg14[%c0_115, %c0_116] : memref<16x32xf32, #tpu.memory_space<vmem>>, vector<16x32xf32>
    tpu.vector_store %arg14[%c0_115, %c0_116], %149 {strides = array<i32>} : memref<16x32xf32, #tpu.memory_space<vmem>>, vector<16x32xf32>,
    %c0_i32_117 = arith.constant 0 : i32
    %c2_i32 = arith.constant 2 : i32
    %151 = arith.addi %c0_i32_117, %c2_i32 : i32
    %c1_i32_118 = arith.constant 1 : i32
    scf.for %arg17 = %c0_i32_117 to %151 step %c1_i32_118  : i32 {
      %152 = arith.index_cast %arg17 : i32 to index
      %153 = memref.load %arg2[%152] : memref<3xi32, #tpu.memory_space<smem>>
      %c1_i32_120 = arith.constant 1 : i32
      %154 = arith.addi %arg17, %c1_i32_120 : i32
      %155 = arith.index_cast %154 : i32 to index
      %156 = memref.load %arg2[%155] : memref<3xi32, #tpu.memory_space<smem>>
      %cst_121 = arith.constant 0xFF800000 : f32
      %157 = vector.broadcast %cst_121 : f32 to vector<1x32xf32>
      %cst_122 = arith.constant 0.000000e+00 : f32
      %158 = vector.broadcast %cst_122 : f32 to vector<1x32xf32>
      %159 = arith.subi %156, %153 : i32
      %160 = arith.addi %153, %159 : i32
      %c1_i32_123 = arith.constant 1 : i32
      %161:2 = scf.for %arg18 = %153 to %160 step %c1_i32_123 iter_args(%arg19 = %157, %arg20 = %158) -> (vector<1x32xf32>, vector<1x32xf32>)  : i32 {
        %172 = arith.index_cast %arg18 : i32 to index
        %c0_126 = arith.constant 0 : index
        %173 = vector.load %arg14[%172, %c0_126] : memref<16x32xf32, #tpu.memory_space<vmem>>, vector<1x32xf32>
        %174 = arith.maximumf %arg19, %173 : vector<1x32xf32>
        %175 = arith.addf %arg20, %173 : vector<1x32xf32>
        scf.yield %174, %175 : vector<1x32xf32>, vector<1x32xf32>
      }
      %162 = arith.index_cast %arg17 : i32 to index
      %163 = memref.load %arg4[%162] : memref<2xf32, #tpu.memory_space<smem>>
      %164 = arith.cmpi sgt, %156, %153 : i32
      %cst_124 = arith.constant 0.000000e+00 : f32
      %165 = vector.broadcast %cst_124 : f32 to vector<1x32xf32>
      %166 = arith.select %164, %161#0, %165 : vector<1x32xf32>
      %167 = vector.broadcast %163 : f32 to vector<1x32xf32>
      %168 = arith.mulf %161#1, %167 : vector<1x32xf32>
      %169 = tpu.concatenate %166, %168 in 1 : vector<1x32xf32>, vector<1x32xf32> -> vector<1x64xf32>
      %170 = arith.index_cast %arg17 : i32 to index
      %c0_125 = arith.constant 0 : index
      %171 = vector.load %arg13[%170, %c0_125] : memref<2x64xf32, #tpu.memory_space<vmem>>, vector<1x64xf32>
      tpu.vector_store %arg13[%170, %c0_125], %169 {strides = array<i32>} : memref<2x64xf32, #tpu.memory_space<vmem>>, vector<1x64xf32>,
    }
    %c2_i32_119 = arith.constant 2 : i32
    return
  }
}

</mosaic_0001>

<llo_original>
// kernel: custom-call
$region0: #{custom-call}
  %s0 = inlined_call_operand.vmem [shape: u32[17], index: 0, kind: output, shape index: {}]

// kernel: custom-call.2
$region0: #{custom-call.2}
  %s0 = inlined_call_operand.vmem [shape: u32[3], index: 0, kind: output, shape index: {}]

// kernel: deeper_gcn_forward.1
$region0: #{deeper_gcn_forward.1}
  #allocation0 [shape = 'u32[]', space=smem, size = 0x4, offset = 0x4, fixed_abs, tag = 'smem constant byte address 0x4 - core index']
  #allocation1 [shape = 'u32[144,128]{1,0:T(1,128)}', space=vmem, size = 0x12000, scoped, tag = 'internal scratch']
  #allocation2 [shape = 'f32[16,32]{1,0:T(8,128)}', space=vmem, size = 0x2000, scoped, tag = 'scratch operand']
  #allocation3 [shape = 'f32[16,96]{1,0:T(8,128)}', space=vmem, size = 0x2000, scoped, tag = 'scratch operand']
  %s0 = inlined_call_operand.vmem [shape: s32[32], index: 0, kind: input, shape index: {}]
  %s1 = inlined_call_operand.vmem [shape: s32[17], index: 1, kind: input, shape index: {}]
  %s2 = inlined_call_operand.vmem [shape: s32[3], index: 2, kind: input, shape index: {}]
  %s3 = inlined_call_operand.vmem [shape: f32[16], index: 3, kind: input, shape index: {}]
  %s4 = inlined_call_operand.vmem [shape: f32[2], index: 4, kind: input, shape index: {}]
  %s5 = inlined_call_operand.vmem [shape: f32[16,32], index: 5, kind: input, shape index: {}]
  %s6 = inlined_call_operand.vmem [shape: f32[3,32,32], index: 6, kind: input, shape index: {}]
  %s7 = inlined_call_operand.vmem [shape: bf16[3,96,32], index: 7, kind: input, shape index: {}]
  %s8 = inlined_call_operand.vmem [shape: f32[3,1,32], index: 8, kind: input, shape index: {}]
  %s9 = inlined_call_operand.vmem [shape: bf16[3,32,32], index: 9, kind: input, shape index: {}]
  %s10 = inlined_call_operand.vmem [shape: f32[3,1,32], index: 10, kind: input, shape index: {}]
  %s11 = inlined_call_operand.vmem [shape: f32[3,1,32], index: 11, kind: input, shape index: {}]
  %s12 = inlined_call_operand.vmem [shape: f32[3,1,32], index: 12, kind: input, shape index: {}]
  %s13 = inlined_call_operand.hbm [shape: f32[2,64], index: 13, kind: output, shape index: {0}]
  %s14 = inlined_call_operand.hbm [shape: f32[16,32], index: 14, kind: output, shape index: {1}]
  %15 = xla_tuple %s13, %s14
  %s16 = sld [smem:[#allocation0]]
  $region146: #{deeper_gcn_forward.1} parent=0
    _
  %s18 = ssub.s32 1, %s16
  %s19 = scalar_select 0, %s18, %s16
  $region1: #{deeper_gcn_forward.1} parent=0
    #allocation4 [shape = 'u8[512]{0}', space=smem, size = 0x200, scoped, tag = 'input window, operand 0, single buffered']
    #allocation5 [shape = 's32[1]{0}', space=sflag, size = 0x4, scoped, tag = 'scoped memory for deeper_gcn_forward.1']
    #allocation6 [shape = 's32[1]{0}', space=sflag, size = 0x4, scoped, tag = 'scoped memory for deeper_gcn_forward.1']
    #allocation7 [shape = 'u8[512]{0}', space=smem, size = 0x200, scoped, tag = 'input window, operand 1, single buffered']
    #allocation8 [shape = 's32[1]{0}', space=sflag, size = 0x4, scoped, tag = 'scoped memory for deeper_gcn_forward.1']
    #allocation9 [shape = 'u8[512]{0}', space=smem, size = 0x200, scoped, tag = 'input window, operand 2, single buffered']
    #allocation10 [shape = 'u8[512]{0}', space=smem, size = 0x200, scoped, tag = 'input window, operand 3, single buffered']
    #allocation11 [shape = 's32[1]{0}', space=sflag, size = 0x4, scoped, tag = 'scoped memory for deeper_gcn_forward.1']
    #allocation12 [shape = 'u8[512]{0}', space=smem, size = 0x200, scoped, tag = 'input window, operand 4, single buffered']
    #allocation13 [shape = 'u8[1024]{0}', space=vmem, size = 0x400, scoped, tag = 'output window, operand 0, single buffered']
    #allocation14 [shape = 'u8[8192]{0}', space=vmem, size = 0x2000, scoped, tag = 'output window, operand 1, single buffered']
    #allocation15 [shape = 's32[1]{0}', space=sflag, size = 0x4, scoped, tag = 'scoped memory for deeper_gcn_forward.1']
    %20 = vsyncpa [#allocation6], 0
    %21 = vsyncpa [#allocation8], 0
    %22 = vsyncpa [#allocation11], 0
    %23 = vsyncpa [#allocation5], 0
    %24 = vsyncpa [#allocation15], 0
    // Predicated region
    $region2: #{deeper_gcn_forward.1} parent=1 // pred_check
      _
    $region3: #{deeper_gcn_forward.1} parent=1 // pred_check_branch
      %26 = sbr.rel (0) target = $region5
    $region4: #{deeper_gcn_forward.1} parent=1 // pred_region
      %s28 = ssub.s32 16, 16
      %29 = vsyncadd [#allocation6], %s28
      %s31 = sshll.u32 %s0, 4
      %s32 = int_to_ptr.vmem [resolvable:$true] %s31
      %34 = dma.vmem_to_smem %s32, 16, [#allocation4], [#allocation6]
    $region5: #{deeper_gcn_forward.1} parent=1 // pred_fallthru
      _
    // Predicated region
    $region6: #{deeper_gcn_forward.1} parent=1 // pred_check
      _
    $region7: #{deeper_gcn_forward.1} parent=1 // pred_check_branch
      %36 = sbr.rel (0) target = $region9
    $region8: #{deeper_gcn_forward.1} parent=1 // pred_region
      %s38 = ssub.s32 16, 16
      %39 = vsyncadd [#allocation8], %s38
      %s41 = sshll.u32 %s1, 4
      %s42 = int_to_ptr.vmem [resolvable:$true] %s41
      %44 = dma.vmem_to_smem %s42, 16, [#allocation7], [#allocation8]
    $region9: #{deeper_gcn_forward.1} parent=1 // pred_fallthru
      _
    // Predicated region
    $region10: #{deeper_gcn_forward.1} parent=1 // pred_check
      _
    $region11: #{deeper_gcn_forward.1} parent=1 // pred_check_branch
      %46 = sbr.rel (0) target = $region13
    $region12: #{deeper_gcn_forward.1} parent=1 // pred_region
      %s48 = ssub.s32 16, 16
      %49 = vsyncadd [#allocation8], %s48
      %s51 = sshll.u32 %s2, 4
      %s52 = int_to_ptr.vmem [resolvable:$true] %s51
      %54 = dma.vmem_to_smem %s52, 16, [#allocation9], [#allocation8]
    $region13: #{deeper_gcn_forward.1} parent=1 // pred_fallthru
      _
    // Predicated region
    $region14: #{deeper_gcn_forward.1} parent=1 // pred_check
      _
    $region15: #{deeper_gcn_forward.1} parent=1 // pred_check_branch
      %56 = sbr.rel (0) target = $region17
    $region16: #{deeper_gcn_forward.1} parent=1 // pred_region
      %s58 = ssub.s32 16, 16
      %59 = vsyncadd [#allocation11], %s58
      %s61 = sshll.u32 %s3, 4
      %s62 = int_to_ptr.vmem [resolvable:$true] %s61
      %64 = dma.vmem_to_smem %s62, 16, [#allocation10], [#allocation11]
    $region17: #{deeper_gcn_forward.1} parent=1 // pred_fallthru
      _
    // Predicated region
    $region18: #{deeper_gcn_forward.1} parent=1 // pred_check
      _
    $region19: #{deeper_gcn_forward.1} parent=1 // pred_check_branch
      %66 = sbr.rel (0) target = $region21
    $region20: #{deeper_gcn_forward.1} parent=1 // pred_region
      %s68 = ssub.s32 16, 16
      %69 = vsyncadd [#allocation11], %s68
      %s71 = sshll.u32 %s4, 4
      %s72 = int_to_ptr.vmem [resolvable:$true] %s71
      %74 = dma.vmem_to_smem %s72, 16, [#allocation12], [#allocation11]
    $region21: #{deeper_gcn_forward.1} parent=1 // pred_fallthru
      _
    // Predicated region
    $region22: #{deeper_gcn_forward.1} parent=1 // pred_check
      _
    $region23: #{deeper_gcn_forward.1} parent=1 // pred_check_branch
      %76 = sbr.rel (0) target = $region25
    $region24: #{deeper_gcn_forward.1} parent=1 // pred_region
      _
    $region25: #{deeper_gcn_forward.1} parent=1 // pred_fallthru
      _
    // Predicated region
    $region26: #{deeper_gcn_forward.1} parent=1 // pred_check
      _
    $region27: #{deeper_gcn_forward.1} parent=1 // pred_check_branch
      %78 = sbr.rel (0) target = $region29
    $region28: #{deeper_gcn_forward.1} parent=1 // pred_region
      _
    $region29: #{deeper_gcn_forward.1} parent=1 // pred_fallthru
      _
    // Predicated region
    $region30: #{deeper_gcn_forward.1} parent=1 // pred_check
      _
    $region31: #{deeper_gcn_forward.1} parent=1 // pred_check_branch
      %80 = sbr.rel (0) target = $region33
    $region32: #{deeper_gcn_forward.1} parent=1 // pred_region
      _
    $region33: #{deeper_gcn_forward.1} parent=1 // pred_fallthru
      _
    // Predicated region
    $region34: #{deeper_gcn_forward.1} parent=1 // pred_check
      _
    $region35: #{deeper_gcn_forward.1} parent=1 // pred_check_branch
      %82 = sbr.rel (0) target = $region37
    $region36: #{deeper_gcn_forward.1} parent=1 // pred_region
      _
    $region37: #{deeper_gcn_forward.1} parent=1 // pred_fallthru
      _
    // Predicated region
    $region38: #{deeper_gcn_forward.1} parent=1 // pred_check
      _
    $region39: #{deeper_gcn_forward.1} parent=1 // pred_check_branch
      %84 = sbr.rel (0) target = $region41
    $region40: #{deeper_gcn_forward.1} parent=1 // pred_region
      _
    $region41: #{deeper_gcn_forward.1} parent=1 // pred_fallthru
      _
    // Predicated region
    $region42: #{deeper_gcn_forward.1} parent=1 // pred_check
      _
    $region43: #{deeper_gcn_forward.1} parent=1 // pred_check_branch
      %86 = sbr.rel (0) target = $region45
    $region44: #{deeper_gcn_forward.1} parent=1 // pred_region
      _
    $region45: #{deeper_gcn_forward.1} parent=1 // pred_fallthru
      _
    // Predicated region
    $region46: #{deeper_gcn_forward.1} parent=1 // pred_check
      _
    $region47: #{deeper_gcn_forward.1} parent=1 // pred_check_branch
      %88 = sbr.rel (0) target = $region49
    $region48: #{deeper_gcn_forward.1} parent=1 // pred_region
      _
    $region49: #{deeper_gcn_forward.1} parent=1 // pred_fallthru
      _
    // Predicated region
    $region50: #{deeper_gcn_forward.1} parent=1 // pred_check
      _
    $region51: #{deeper_gcn_forward.1} parent=1 // pred_check_branch
      %90 = sbr.rel (0) target = $region53
    $region52: #{deeper_gcn_forward.1} parent=1 // pred_region
      _
    $region53: #{deeper_gcn_forward.1} parent=1 // pred_fallthru
      _
    // Predicated region
    $region54: #{deeper_gcn_forward.1} parent=1 // pred_check
      _
    $region55: #{deeper_gcn_forward.1} parent=1 // pred_check_branch
      %92 = sbr.rel (0) target = $region57
    $region56: #{deeper_gcn_forward.1} parent=1 // pred_region
      %93 = dma.done [#allocation6], 16
    $region57: #{deeper_gcn_forward.1} parent=1 // pred_fallthru
      _
    // Predicated region
    $region58: #{deeper_gcn_forward.1} parent=1 // pred_check
      _
    $region59: #{deeper_gcn_forward.1} parent=1 // pred_check_branch
      %95 = sbr.rel (0) target = $region61
    $region60: #{deeper_gcn_forward.1} parent=1 // pred_region
      %96 = dma.done [#allocation8], 16
    $region61: #{deeper_gcn_forward.1} parent=1 // pred_fallthru
      _
    // Predicated region
    $region62: #{deeper_gcn_forward.1} parent=1 // pred_check
      _
    $region63: #{deeper_gcn_forward.1} parent=1 // pred_check_branch
      %98 = sbr.rel (0) target = $region65
    $region64: #{deeper_gcn_forward.1} parent=1 // pred_region
      %99 = dma.done [#allocation8], 16
    $region65: #{deeper_gcn_forward.1} parent=1 // pred_fallthru
      _
    // Predicated region
    $region66: #{deeper_gcn_forward.1} parent=1 // pred_check
      _
    $region67: #{deeper_gcn_forward.1} parent=1 // pred_check_branch
      %101 = sbr.rel (0) target = $region69
    $region68: #{deeper_gcn_forward.1} parent=1 // pred_region
      %102 = dma.done [#allocation11], 16
    $region69: #{deeper_gcn_forward.1} parent=1 // pred_fallthru
      _
    // Predicated region
    $region70: #{deeper_gcn_forward.1} parent=1 // pred_check
      _
    $region71: #{deeper_gcn_forward.1} parent=1 // pred_check_branch
      %104 = sbr.rel (0) target = $region73
    $region72: #{deeper_gcn_forward.1} parent=1 // pred_region
      %105 = dma.done [#allocation11], 16
    $region73: #{deeper_gcn_forward.1} parent=1 // pred_fallthru
      _
    %106 = sfence
    %v108 = vld [vmem:[%s5] sm:$0xff]
    %v109 = vld [vmem:[%s5 + $0x8] sm:$0xff]
    %vm110 = vcmask 261120
    %111 = vst.msk [vmem:[#allocation2] sm:$0xff] %vm110, %v108
    %112 = vst.msk [vmem:[#allocation2 + $0x8] sm:$0xff] %vm110, %v109
    loop: start=0, step=1, limit=16
    $region74: #{deeper_gcn_forward.1} parent=1 // loop_pre_header
      _
    $region75: #{deeper_gcn_forward.1} parent=1 // loop_header
      %s114 = sphi 0, %s118
      %p115 = scmp.ge.s32.totalorder %s114, 16
    $region76: #{deeper_gcn_forward.1} parent=1 // loop_header_branch
      %117 = sbr.rel (%p115) target = $region80
    $region77: #{deeper_gcn_forward.1} parent=1 // loop_body
      %s119 = sld [smem:[#allocation7 + %s114]]
      %s120 = sadd.s32 %s114, 1
      %s121 = sld [smem:[#allocation7 + %s120]]
      // While loop
      $region81: #{deeper_gcn_forward.1} parent=77 // loop_pre_header
        _
      $region82: #{deeper_gcn_forward.1} parent=77 // loop_header
        %s123 = sphi %s119, %s125
        %p124 = scmp.ge.s32.totalorder %s123, %s121
        %v128 = vphi -inf, %v137
        %v129 = vphi inf, %v138
        %v130 = vphi 0.0, %v139
      $region83: #{deeper_gcn_forward.1} parent=77 // loop_header_branch
        %127 = sbr.rel (%p124) target = $region87
      $region84: #{deeper_gcn_forward.1} parent=77 // loop_body
        %s131 = sld [smem:[#allocation4 + %s123]]
        %s132 = scalar_lea.vmem [#allocation2], %s131
        %v133 = vld [vmem:[%s132] sm:$0x1]
        %s134 = scalar_lea.vmem %s6, %s123
        %v135 = vld [vmem:[%s134] sm:$0x1]
        %v136 = vadd.f32 %v133, %v135
        %v137 = vmax.f32 %v128, %v136
        %v138 = vmin.f32 %v129, %v136
        %v139 = vadd.f32 %v130, %v136
      $region85: #{deeper_gcn_forward.1} parent=77 // loop_footer
        %s125 = sadd.s32 %s123, 1
      $region86: #{deeper_gcn_forward.1} parent=77 // loop_footer_branch
        %122 = sbr.rel target = $region82
      $region87: #{deeper_gcn_forward.1} parent=77 // loop_exit
        _
      %p140 = scmp.gt.s32.totalorder %s121, %s119
      %s141 = sld [smem:[#allocation10 + %s114]]
      %s142 = scalar_select %p140, 1, 0
      %v143 = vstv %s142
      %vm144 = vcmp.eq.s32.totalorder %v143, 1
      %v145 = vsel %vm144, %v128, 0.0
      %v146 = vsel %vm144, %v129, 0.0
      %v147 = vstv %s141
      %v148 = vmul.f32 %v130, %v147
      %150 = vrot.lane.b32.xlu0 %v146, 32
      %v151 = vpop.permute.xlu0 %150
      %154 = vrot.lane.b32.xlu0 %v148, 64
      %v155 = vpop.permute.xlu0 %154
      %v157 = vsel %vm110, %v145, %v151
      %vm158 = vcmask 523264
      %v159 = vsel %vm158, %v157, %v155
      %s160 = scalar_lea.vmem [#allocation3], %s114
      %vm161 = vcmask 778240
      %162 = vst.msk [vmem:[%s160] sm:$0x1] %vm161, %v159
    $region78: #{deeper_gcn_forward.1} parent=1 // loop_footer
      %s118 = sadd.s32 1, %s114
    $region79: #{deeper_gcn_forward.1} parent=1 // loop_footer_branch
      %113 = sbr.rel target = $region75
    $region80: #{deeper_gcn_forward.1} parent=1 // loop_exit
      _
    %v163 = vld [vmem:[#allocation3] sm:$0xff]
    %v164 = vld [vmem:[#allocation3 + $0x8] sm:$0xff]
    %v165 = vpack.c.bf16 %v164, %v163
    %v166 = vld [vmem:[%s7] sm:$0xf]
    %v167 = vld [vmem:[%s7 + $0x4] sm:$0xf]
    %v168 = vld [vmem:[%s7 + $0x8] sm:$0xf]
    %v169 = vld [vmem:[%s7 + $0xc] sm:$0xf]
    %v170 = vld [vmem:[%s7 + $0x10] sm:$0xf]
    %v171 = vld [vmem:[%s7 + $0x14] sm:$0xf]
    %v172 = vld [vmem:[%s7 + $0x18] sm:$0xf]
    %v173 = vld [vmem:[%s7 + $0x1c] sm:$0xf]
    %v174 = vld [vmem:[%s7 + $0x20] sm:$0xf]
    %v175 = vld [vmem:[%s7 + $0x24] sm:$0xf]
    %v176 = vld [vmem:[%s7 + $0x28] sm:$0xf]
    %v177 = vld [vmem:[%s7 + $0x2c] sm:$0xf]
    %v178 = vld [vmem:[%s8] sm:$0x1]
    %v180 = vlaneseq
    %v181 = vshrl.u32 %v180, 7
    %v182 = vsub.s32 0, %v181
    %v183 = vrot.slane %v178, %v182
    %v197 = vunpack.c.l.b16 %v166
    %v198 = vunpack.c.l.b16 %v167
    %v199 = vunpack.c.l.b16 %v168
    %v200 = vunpack.c.l.b16 %v169
    %v201 = vunpack.c.l.b16 %v170
    %v202 = vunpack.c.l.b16 %v171
    %v203 = vunpack.c.l.b16 %v172
    %v204 = vunpack.c.l.b16 %v173
    %v205 = vunpack.c.l.b16 %v174
    %v206 = vunpack.c.l.b16 %v175
    %v207 = vunpack.c.l.b16 %v176
    %v208 = vunpack.c.l.b16 %v177
    %v209 = vpack.c.b16 %v198, %v197
    %v210 = vpack.c.b16 %v200, %v199
    %v211 = vpack.c.b16 %v202, %v201
    %v212 = vpack.c.b16 %v204, %v203
    %v213 = vpack.c.b16 %v206, %v205
    %v214 = vpack.c.b16 %v208, %v207
    %vm221 = vcmask 785408
    %v223 = vsel %vm221, %v165, 0
    %225 = vmatprep.subr.bf16.mxu0 0
    %226 = vmatpush1.bf16.msra.mxu0 %v209
    %227 = vmatprep.subr.bf16.mxu0 0
    %228 = vmatpush1.bf16.msra.mxu0 %v210
    %229 = vmatprep.subr.bf16.mxu0 0
    %230 = vmatpush1.bf16.msra.mxu0 %v211
    %231 = vmatprep.subr.bf16.mxu0 0
    %232 = vmatpush1.bf16.msra.mxu0 %v212
    %233 = vmatprep.subr.bf16.mxu0 0
    %234 = vmatpush1.bf16.msra.mxu0 %v213
    %235 = vmatprep.subr.bf16.mxu0 0
    %236 = vmatpush1.bf16.msra.mxu0 %v214
    %237 = vmatprep.subr.bf16.mxu0 0
    %238 = vmatpush1.bf16.msra.mxu0 0
    %239 = vmatprep.subr.bf16.mxu0 0
    %240 = vmatpush1.bf16.msra.mxu0 0
    %241 = vmatprep.subr.bf16.mxu0 0
    %242 = vmatpush1.bf16.msra.mxu0 0
    %243 = vmatprep.subr.bf16.mxu0 0
    %244 = vmatpush1.bf16.msra.mxu0 0
    %245 = vmatprep.subr.bf16.mxu0 0
    %246 = vmatpush1.bf16.msra.mxu0 0
    %247 = vmatprep.subr.bf16.mxu0 0
    %248 = vmatpush1.bf16.msra.mxu0 0
    %249 = vmatprep.subr.bf16.mxu0 0
    %250 = vmatpush1.bf16.msra.mxu0 0
    %251 = vmatprep.subr.bf16.mxu0 0
    %252 = vmatpush1.bf16.msra.mxu0 0
    %253 = vmatprep.subr.bf16.mxu0 0
    %254 = vmatpush1.bf16.msra.mxu0 0
    %255 = vmatprep.subr.bf16.mxu0 0
    %256 = vmatpush1.bf16.msra.mxu0 0
    %257 = vmatprep.mubr.bf16.mxu0 0
    %258 = vmatmul.mubr.bf16.gmra.mrb[0].mxu0 %v223
    %v259 = vpop.f32.mrb[0].mxu0
    %v260 = vadd.f32 %v183, %v259
    %v261 = vpop.f32.mrb[0].mxu0
    %v262 = vpop.f32.mrb[0].mxu0
    %v263 = vadd.f32 %v183, %v262
    %v264 = vpop.f32.mrb[0].mxu0
    %265 = vdwg.mxu0
    %v266 = vld [vmem:[#allocation2] sm:$0xff]
    %v267 = vld [vmem:[#allocation2 + $0x8] sm:$0xff]
    %v268 = vadd.f32 %v266, %v260
    %v269 = vadd.f32 %v267, %v263
    %v270 = vpack.c.bf16 %v269, %v268
    %v271 = vld [vmem:[%s9] sm:$0xf]
    %v272 = vld [vmem:[%s9 + $0x4] sm:$0xf]
    %v273 = vld [vmem:[%s9 + $0x8] sm:$0xf]
    %v274 = vld [vmem:[%s9 + $0xc] sm:$0xf]
    %v275 = vld [vmem:[%s10] sm:$0x1]
    %v277 = vlaneseq
    %v278 = vshrl.u32 %v277, 7
    %v279 = vsub.s32 0, %v278
    %v280 = vrot.slane %v275, %v279
    %v286 = vunpack.c.l.b16 %v271
    %v287 = vunpack.c.l.b16 %v272
    %v288 = vunpack.c.l.b16 %v273
    %v289 = vunpack.c.l.b16 %v274
    %v290 = vpack.c.b16 %v287, %v286
    %v291 = vpack.c.b16 %v289, %v288
    %v295 = vsel %vm110, %v270, 0
    %297 = vmatprep.subr.bf16.mxu0 0
    %298 = vmatpush1.bf16.msra.mxu0 %v290
    %299 = vmatprep.subr.bf16.mxu0 0
    %300 = vmatpush1.bf16.msra.mxu0 %v291
    %301 = vmatprep.subr.bf16.mxu0 0
    %302 = vmatpush1.bf16.msra.mxu0 0
    %303 = vmatprep.subr.bf16.mxu0 0
    %304 = vmatpush1.bf16.msra.mxu0 0
    %305 = vmatprep.subr.bf16.mxu0 0
    %306 = vmatpush1.bf16.msra.mxu0 0
    %307 = vmatprep.subr.bf16.mxu0 0
    %308 = vmatpush1.bf16.msra.mxu0 0
    %309 = vmatprep.subr.bf16.mxu0 0
    %310 = vmatpush1.bf16.msra.mxu0 0
    %311 = vmatprep.subr.bf16.mxu0 0
    %312 = vmatpush1.bf16.msra.mxu0 0
    %313 = vmatprep.subr.bf16.mxu0 0
    %314 = vmatpush1.bf16.msra.mxu0 0
    %315 = vmatprep.subr.bf16.mxu0 0
    %316 = vmatpush1.bf16.msra.mxu0 0
    %317 = vmatprep.subr.bf16.mxu0 0
    %318 = vmatpush1.bf16.msra.mxu0 0
    %319 = vmatprep.subr.bf16.mxu0 0
    %320 = vmatpush1.bf16.msra.mxu0 0
    %321 = vmatprep.subr.bf16.mxu0 0
    %322 = vmatpush1.bf16.msra.mxu0 0
    %323 = vmatprep.subr.bf16.mxu0 0
    %324 = vmatpush1.bf16.msra.mxu0 0
    %325 = vmatprep.subr.bf16.mxu0 0
    %326 = vmatpush1.bf16.msra.mxu0 0
    %327 = vmatprep.subr.bf16.mxu0 0
    %328 = vmatpush1.bf16.msra.mxu0 0
    %329 = vmatprep.mubr.bf16.mxu0 0
    %330 = vmatmul.mubr.bf16.gmra.mrb[0].mxu0 %v295
    %v331 = vpop.f32.mrb[0].mxu0
    %v332 = vadd.f32 %v280, %v331
    %v333 = vpop.f32.mrb[0].mxu0
    %v334 = vpop.f32.mrb[0].mxu0
    %v335 = vadd.f32 %v280, %v334
    %v336 = vpop.f32.mrb[0].mxu0
    %337 = vdwg.mxu0
    %338 = vst.msk [vmem:[#allocation2] sm:$0xff] %vm110, %v332
    %339 = vst.msk [vmem:[#allocation2 + $0x8] sm:$0xff] %vm110, %v335
    %v340 = vld [vmem:[#allocation2] sm:$0xff]
    %v341 = vld [vmem:[#allocation2 + $0x8] sm:$0xff]
    %s342 = scalar_lea.vmem %s11, 1
    %v343 = vld [vmem:[%s342] sm:$0x1]
    %s344 = scalar_lea.vmem %s12, 1
    %v345 = vld [vmem:[%s344] sm:$0x1]
    %v346 = vsel %vm110, %v340, 0.0
    %347 = vadd.xlane.f32.xlu0 %v346
    %v348 = vpop.xlane.xlu0 %347
    %v349 = vsel %vm110, %v341, 0.0
    %350 = vadd.xlane.f32.xlu0 %v349
    %v351 = vpop.xlane.xlu0 %350
    %v352 = vrcp.pop 32.0
    %v353 = vmul.f32 %v348, %v352
    %v354 = vmul.f32 %v351, %v352
    %v355 = vsub.f32 %v340, %v353
    %v356 = vsub.f32 %v341, %v354
    %v357 = vmul.f32 %v355, %v355
    %v358 = vmul.f32 %v356, %v356
    %v359 = vsel %vm110, %v357, 0.0
    %360 = vadd.xlane.f32.xlu0 %v359
    %v361 = vpop.xlane.xlu0 %360
    %v362 = vsel %vm110, %v358, 0.0
    %363 = vadd.xlane.f32.xlu0 %v362
    %v364 = vpop.xlane.xlu0 %363
    %v365 = vmul.f32 %v361, %v352
    %v366 = vmul.f32 %v364, %v352
    %v367 = vadd.f32 %v365, 1e-05
    %v368 = vadd.f32 %v366, 1e-05
    %v369 = vrsqrt.pop %v367
    %v370 = vrsqrt.pop %v368
    %v371 = vmul.f32 %v355, %v369
    %v372 = vmul.f32 %v356, %v370
    %v374 = vlaneseq
    %v375 = vshrl.u32 %v374, 7
    %v376 = vsub.s32 0, %v375
    %v377 = vrot.slane %v343, %v376
    %v379 = vmul.f32 %v371, %v377
    %v380 = vmul.f32 %v372, %v377
    %v382 = vlaneseq
    %v383 = vshrl.u32 %v382, 7
    %v384 = vsub.s32 0, %v383
    %v385 = vrot.slane %v345, %v384
    %v387 = vadd.f32 %v379, %v385
    %v388 = vadd.f32 %v380, %v385
    %v389 = vmax.f32 %v387, 0.0
    %v390 = vmax.f32 %v388, 0.0
    %391 = vst.msk [vmem:[#allocation2] sm:$0xff] %vm110, %v389
    %392 = vst.msk [vmem:[#allocation2 + $0x8] sm:$0xff] %vm110, %v390
    loop: start=0, step=1, limit=16
    $region88: #{deeper_gcn_forward.1} parent=1 // loop_pre_header
      _
    $region89: #{deeper_gcn_forward.1} parent=1 // loop_header
      %s394 = sphi 0, %s398
      %p395 = scmp.ge.s32.totalorder %s394, 16
    $region90: #{deeper_gcn_forward.1} parent=1 // loop_header_branch
      %397 = sbr.rel (%p395) target = $region94
    $region91: #{deeper_gcn_forward.1} parent=1 // loop_body
      %s399 = sld [smem:[#allocation7 + %s394]]
      %s400 = sadd.s32 %s394, 1
      %s401 = sld [smem:[#allocation7 + %s400]]
      // While loop
      $region95: #{deeper_gcn_forward.1} parent=91 // loop_pre_header
        _
      $region96: #{deeper_gcn_forward.1} parent=91 // loop_header
        %s403 = sphi %s399, %s405
        %p404 = scmp.ge.s32.totalorder %s403, %s401
        %v408 = vphi -inf, %v418
        %v409 = vphi inf, %v419
        %v410 = vphi 0.0, %v420
      $region97: #{deeper_gcn_forward.1} parent=91 // loop_header_branch
        %407 = sbr.rel (%p404) target = $region101
      $region98: #{deeper_gcn_forward.1} parent=91 // loop_body
        %s411 = sld [smem:[#allocation4 + %s403]]
        %s412 = scalar_lea.vmem [#allocation2], %s411
        %v413 = vld [vmem:[%s412] sm:$0x1]
        %s414 = sadd.s32 %s403, 32
        %s415 = scalar_lea.vmem %s6, %s414
        %v416 = vld [vmem:[%s415] sm:$0x1]
        %v417 = vadd.f32 %v413, %v416
        %v418 = vmax.f32 %v408, %v417
        %v419 = vmin.f32 %v409, %v417
        %v420 = vadd.f32 %v410, %v417
      $region99: #{deeper_gcn_forward.1} parent=91 // loop_footer
        %s405 = sadd.s32 %s403, 1
      $region100: #{deeper_gcn_forward.1} parent=91 // loop_footer_branch
        %402 = sbr.rel target = $region96
      $region101: #{deeper_gcn_forward.1} parent=91 // loop_exit
        _
      %p421 = scmp.gt.s32.totalorder %s401, %s399
      %s422 = sld [smem:[#allocation10 + %s394]]
      %s423 = scalar_select %p421, 1, 0
      %v424 = vstv %s423
      %vm425 = vcmp.eq.s32.totalorder %v424, 1
      %v426 = vsel %vm425, %v408, 0.0
      %v427 = vsel %vm425, %v409, 0.0
      %v428 = vstv %s422
      %v429 = vmul.f32 %v410, %v428
      %431 = vrot.lane.b32.xlu0 %v427, 32
      %v432 = vpop.permute.xlu0 %431
      %435 = vrot.lane.b32.xlu0 %v429, 64
      %v436 = vpop.permute.xlu0 %435
      %v438 = vsel %vm110, %v426, %v432
      %vm439 = vcmask 523264
      %v440 = vsel %vm439, %v438, %v436
      %s441 = scalar_lea.vmem [#allocation3], %s394
      %vm442 = vcmask 778240
      %443 = vst.msk [vmem:[%s441] sm:$0x1] %vm442, %v440
    $region92: #{deeper_gcn_forward.1} parent=1 // loop_footer
      %s398 = sadd.s32 1, %s394
    $region93: #{deeper_gcn_forward.1} parent=1 // loop_footer_branch
      %393 = sbr.rel target = $region89
    $region94: #{deeper_gcn_forward.1} parent=1 // loop_exit
      _
    %v444 = vld [vmem:[#allocation3] sm:$0xff]
    %v445 = vld [vmem:[#allocation3 + $0x8] sm:$0xff]
    %v446 = vpack.c.bf16 %v445, %v444
    %s447 = scalar_lea.vmem %s7, 48
    %v448 = vld [vmem:[%s447] sm:$0xf]
    %v449 = vld [vmem:[%s447 + $0x4] sm:$0xf]
    %v450 = vld [vmem:[%s447 + $0x8] sm:$0xf]
    %v451 = vld [vmem:[%s447 + $0xc] sm:$0xf]
    %v452 = vld [vmem:[%s447 + $0x10] sm:$0xf]
    %v453 = vld [vmem:[%s447 + $0x14] sm:$0xf]
    %v454 = vld [vmem:[%s447 + $0x18] sm:$0xf]
    %v455 = vld [vmem:[%s447 + $0x1c] sm:$0xf]
    %v456 = vld [vmem:[%s447 + $0x20] sm:$0xf]
    %v457 = vld [vmem:[%s447 + $0x24] sm:$0xf]
    %v458 = vld [vmem:[%s447 + $0x28] sm:$0xf]
    %v459 = vld [vmem:[%s447 + $0x2c] sm:$0xf]
    %s460 = scalar_lea.vmem %s8, 1
    %v461 = vld [vmem:[%s460] sm:$0x1]
    %v463 = vlaneseq
    %v464 = vshrl.u32 %v463, 7
    %v465 = vsub.s32 0, %v464
    %v466 = vrot.slane %v461, %v465
    %v480 = vunpack.c.l.b16 %v448
    %v481 = vunpack.c.l.b16 %v449
    %v482 = vunpack.c.l.b16 %v450
    %v483 = vunpack.c.l.b16 %v451
    %v484 = vunpack.c.l.b16 %v452
    %v485 = vunpack.c.l.b16 %v453
    %v486 = vunpack.c.l.b16 %v454
    %v487 = vunpack.c.l.b16 %v455
    %v488 = vunpack.c.l.b16 %v456
    %v489 = vunpack.c.l.b16 %v457
    %v490 = vunpack.c.l.b16 %v458
    %v491 = vunpack.c.l.b16 %v459
    %v492 = vpack.c.b16 %v481, %v480
    %v493 = vpack.c.b16 %v483, %v482
    %v494 = vpack.c.b16 %v485, %v484
    %v495 = vpack.c.b16 %v487, %v486
    %v496 = vpack.c.b16 %v489, %v488
    %v497 = vpack.c.b16 %v491, %v490
    %v505 = vsel %vm221, %v446, 0
    %507 = vmatprep.subr.bf16.mxu0 0
    %508 = vmatpush1.bf16.msra.mxu0 %v492
    %509 = vmatprep.subr.bf16.mxu0 0
    %510 = vmatpush1.bf16.msra.mxu0 %v493
    %511 = vmatprep.subr.bf16.mxu0 0
    %512 = vmatpush1.bf16.msra.mxu0 %v494
    %513 = vmatprep.subr.bf16.mxu0 0
    %514 = vmatpush1.bf16.msra.mxu0 %v495
    %515 = vmatprep.subr.bf16.mxu0 0
    %516 = vmatpush1.bf16.msra.mxu0 %v496
    %517 = vmatprep.subr.bf16.mxu0 0
    %518 = vmatpush1.bf16.msra.mxu0 %v497
    %519 = vmatprep.subr.bf16.mxu0 0
    %520 = vmatpush1.bf16.msra.mxu0 0
    %521 = vmatprep.subr.bf16.mxu0 0
    %522 = vmatpush1.bf16.msra.mxu0 0
    %523 = vmatprep.subr.bf16.mxu0 0
    %524 = vmatpush1.bf16.msra.mxu0 0
    %525 = vmatprep.subr.bf16.mxu0 0
    %526 = vmatpush1.bf16.msra.mxu0 0
    %527 = vmatprep.subr.bf16.mxu0 0
    %528 = vmatpush1.bf16.msra.mxu0 0
    %529 = vmatprep.subr.bf16.mxu0 0
    %530 = vmatpush1.bf16.msra.mxu0 0
    %531 = vmatprep.subr.bf16.mxu0 0
    %532 = vmatpush1.bf16.msra.mxu0 0
    %533 = vmatprep.subr.bf16.mxu0 0
    %534 = vmatpush1.bf16.msra.mxu0 0
    %535 = vmatprep.subr.bf16.mxu0 0
    %536 = vmatpush1.bf16.msra.mxu0 0
    %537 = vmatprep.subr.bf16.mxu0 0
    %538 = vmatpush1.bf16.msra.mxu0 0
    %539 = vmatprep.mubr.bf16.mxu0 0
    %540 = vmatmul.mubr.bf16.gmra.mrb[0].mxu0 %v505
    %v541 = vpop.f32.mrb[0].mxu0
    %v542 = vadd.f32 %v466, %v541
    %v543 = vpop.f32.mrb[0].mxu0
    %v544 = vpop.f32.mrb[0].mxu0
    %v545 = vadd.f32 %v466, %v544
    %v546 = vpop.f32.mrb[0].mxu0
    %547 = vdwg.mxu0
    %v548 = vld [vmem:[#allocation2] sm:$0xff]
    %v549 = vld [vmem:[#allocation2 + $0x8] sm:$0xff]
    %v550 = vadd.f32 %v548, %v542
    %v551 = vadd.f32 %v549, %v545
    %v552 = vpack.c.bf16 %v551, %v550
    %s553 = scalar_lea.vmem %s9, 16
    %v554 = vld [vmem:[%s553] sm:$0xf]
    %v555 = vld [vmem:[%s553 + $0x4] sm:$0xf]
    %v556 = vld [vmem:[%s553 + $0x8] sm:$0xf]
    %v557 = vld [vmem:[%s553 + $0xc] sm:$0xf]
    %s558 = scalar_lea.vmem %s10, 1
    %v559 = vld [vmem:[%s558] sm:$0x1]
    %v561 = vlaneseq
    %v562 = vshrl.u32 %v561, 7
    %v563 = vsub.s32 0, %v562
    %v564 = vrot.slane %v559, %v563
    %v570 = vunpack.c.l.b16 %v554
    %v571 = vunpack.c.l.b16 %v555
    %v572 = vunpack.c.l.b16 %v556
    %v573 = vunpack.c.l.b16 %v557
    %v574 = vpack.c.b16 %v571, %v570
    %v575 = vpack.c.b16 %v573, %v572
    %v579 = vsel %vm110, %v552, 0
    %581 = vmatprep.subr.bf16.mxu0 0
    %582 = vmatpush1.bf16.msra.mxu0 %v574
    %583 = vmatprep.subr.bf16.mxu0 0
    %584 = vmatpush1.bf16.msra.mxu0 %v575
    %585 = vmatprep.subr.bf16.mxu0 0
    %586 = vmatpush1.bf16.msra.mxu0 0
    %587 = vmatprep.subr.bf16.mxu0 0
    %588 = vmatpush1.bf16.msra.mxu0 0
    %589 = vmatprep.subr.bf16.mxu0 0
    %590 = vmatpush1.bf16.msra.mxu0 0
    %591 = vmatprep.subr.bf16.mxu0 0
    %592 = vmatpush1.bf16.msra.mxu0 0
    %593 = vmatprep.subr.bf16.mxu0 0
    %594 = vmatpush1.bf16.msra.mxu0 0
    %595 = vmatprep.subr.bf16.mxu0 0
    %596 = vmatpush1.bf16.msra.mxu0 0
    %597 = vmatprep.subr.bf16.mxu0 0
    %598 = vmatpush1.bf16.msra.mxu0 0
    %599 = vmatprep.subr.bf16.mxu0 0
    %600 = vmatpush1.bf16.msra.mxu0 0
    %601 = vmatprep.subr.bf16.mxu0 0
    %602 = vmatpush1.bf16.msra.mxu0 0
    %603 = vmatprep.subr.bf16.mxu0 0
    %604 = vmatpush1.bf16.msra.mxu0 0
    %605 = vmatprep.subr.bf16.mxu0 0
    %606 = vmatpush1.bf16.msra.mxu0 0
    %607 = vmatprep.subr.bf16.mxu0 0
    %608 = vmatpush1.bf16.msra.mxu0 0
    %609 = vmatprep.subr.bf16.mxu0 0
    %610 = vmatpush1.bf16.msra.mxu0 0
    %611 = vmatprep.subr.bf16.mxu0 0
    %612 = vmatpush1.bf16.msra.mxu0 0
    %613 = vmatprep.mubr.bf16.mxu0 0
    %614 = vmatmul.mubr.bf16.gmra.mrb[0].mxu0 %v579
    %v615 = vpop.f32.mrb[0].mxu0
    %v616 = vadd.f32 %v564, %v615
    %v617 = vpop.f32.mrb[0].mxu0
    %v618 = vpop.f32.mrb[0].mxu0
    %v619 = vadd.f32 %v564, %v618
    %v620 = vpop.f32.mrb[0].mxu0
    %621 = vdwg.mxu0
    %v622 = vadd.f32 %v616, %v340
    %v623 = vadd.f32 %v619, %v341
    %624 = vst.msk [vmem:[#allocation2] sm:$0xff] %vm110, %v622
    %625 = vst.msk [vmem:[#allocation2 + $0x8] sm:$0xff] %vm110, %v623
    %v626 = vld [vmem:[#allocation2] sm:$0xff]
    %v627 = vld [vmem:[#allocation2 + $0x8] sm:$0xff]
    %s628 = scalar_lea.vmem %s11, 2
    %v629 = vld [vmem:[%s628] sm:$0x1]
    %s630 = scalar_lea.vmem %s12, 2
    %v631 = vld [vmem:[%s630] sm:$0x1]
    %v632 = vsel %vm110, %v626, 0.0
    %633 = vadd.xlane.f32.xlu0 %v632
    %v634 = vpop.xlane.xlu0 %633
    %v635 = vsel %vm110, %v627, 0.0
    %636 = vadd.xlane.f32.xlu0 %v635
    %v637 = vpop.xlane.xlu0 %636
    %v638 = vmul.f32 %v634, %v352
    %v639 = vmul.f32 %v637, %v352
    %v640 = vsub.f32 %v626, %v638
    %v641 = vsub.f32 %v627, %v639
    %v642 = vmul.f32 %v640, %v640
    %v643 = vmul.f32 %v641, %v641
    %v644 = vsel %vm110, %v642, 0.0
    %645 = vadd.xlane.f32.xlu0 %v644
    %v646 = vpop.xlane.xlu0 %645
    %v647 = vsel %vm110, %v643, 0.0
    %648 = vadd.xlane.f32.xlu0 %v647
    %v649 = vpop.xlane.xlu0 %648
    %v650 = vmul.f32 %v646, %v352
    %v651 = vmul.f32 %v649, %v352
    %v652 = vadd.f32 %v650, 1e-05
    %v653 = vadd.f32 %v651, 1e-05
    %v654 = vrsqrt.pop %v652
    %v655 = vrsqrt.pop %v653
    %v656 = vmul.f32 %v640, %v654
    %v657 = vmul.f32 %v641, %v655
    %v659 = vlaneseq
    %v660 = vshrl.u32 %v659, 7
    %v661 = vsub.s32 0, %v660
    %v662 = vrot.slane %v629, %v661
    %v664 = vmul.f32 %v656, %v662
    %v665 = vmul.f32 %v657, %v662
    %v667 = vlaneseq
    %v668 = vshrl.u32 %v667, 7
    %v669 = vsub.s32 0, %v668
    %v670 = vrot.slane %v631, %v669
    %v672 = vadd.f32 %v664, %v670
    %v673 = vadd.f32 %v665, %v670
    %v674 = vmax.f32 %v672, 0.0
    %v675 = vmax.f32 %v673, 0.0
    %676 = vst.msk [vmem:[#allocation2] sm:$0xff] %vm110, %v674
    %677 = vst.msk [vmem:[#allocation2 + $0x8] sm:$0xff] %vm110, %v675
    loop: start=0, step=1, limit=16
    $region102: #{deeper_gcn_forward.1} parent=1 // loop_pre_header
      _
    $region103: #{deeper_gcn_forward.1} parent=1 // loop_header
      %s679 = sphi 0, %s683
      %p680 = scmp.ge.s32.totalorder %s679, 16
    $region104: #{deeper_gcn_forward.1} parent=1 // loop_header_branch
      %682 = sbr.rel (%p680) target = $region108
    $region105: #{deeper_gcn_forward.1} parent=1 // loop_body
      %s684 = sld [smem:[#allocation7 + %s679]]
      %s685 = sadd.s32 %s679, 1
      %s686 = sld [smem:[#allocation7 + %s685]]
      // While loop
      $region109: #{deeper_gcn_forward.1} parent=105 // loop_pre_header
        _
      $region110: #{deeper_gcn_forward.1} parent=105 // loop_header
        %s688 = sphi %s684, %s690
        %p689 = scmp.ge.s32.totalorder %s688, %s686
        %v693 = vphi -inf, %v703
        %v694 = vphi inf, %v704
        %v695 = vphi 0.0, %v705
      $region111: #{deeper_gcn_forward.1} parent=105 // loop_header_branch
        %692 = sbr.rel (%p689) target = $region115
      $region112: #{deeper_gcn_forward.1} parent=105 // loop_body
        %s696 = sld [smem:[#allocation4 + %s688]]
        %s697 = scalar_lea.vmem [#allocation2], %s696
        %v698 = vld [vmem:[%s697] sm:$0x1]
        %s699 = sadd.s32 %s688, 64
        %s700 = scalar_lea.vmem %s6, %s699
        %v701 = vld [vmem:[%s700] sm:$0x1]
        %v702 = vadd.f32 %v698, %v701
        %v703 = vmax.f32 %v693, %v702
        %v704 = vmin.f32 %v694, %v702
        %v705 = vadd.f32 %v695, %v702
      $region113: #{deeper_gcn_forward.1} parent=105 // loop_footer
        %s690 = sadd.s32 %s688, 1
      $region114: #{deeper_gcn_forward.1} parent=105 // loop_footer_branch
        %687 = sbr.rel target = $region110
      $region115: #{deeper_gcn_forward.1} parent=105 // loop_exit
        _
      %p706 = scmp.gt.s32.totalorder %s686, %s684
      %s707 = sld [smem:[#allocation10 + %s679]]
      %s708 = scalar_select %p706, 1, 0
      %v709 = vstv %s708
      %vm710 = vcmp.eq.s32.totalorder %v709, 1
      %v711 = vsel %vm710, %v693, 0.0
      %v712 = vsel %vm710, %v694, 0.0
      %v713 = vstv %s707
      %v714 = vmul.f32 %v695, %v713
      %716 = vrot.lane.b32.xlu0 %v712, 32
      %v717 = vpop.permute.xlu0 %716
      %720 = vrot.lane.b32.xlu0 %v714, 64
      %v721 = vpop.permute.xlu0 %720
      %v723 = vsel %vm110, %v711, %v717
      %vm724 = vcmask 523264
      %v725 = vsel %vm724, %v723, %v721
      %s726 = scalar_lea.vmem [#allocation3], %s679
      %vm727 = vcmask 778240
      %728 = vst.msk [vmem:[%s726] sm:$0x1] %vm727, %v725
    $region106: #{deeper_gcn_forward.1} parent=1 // loop_footer
      %s683 = sadd.s32 1, %s679
    $region107: #{deeper_gcn_forward.1} parent=1 // loop_footer_branch
      %678 = sbr.rel target = $region103
    $region108: #{deeper_gcn_forward.1} parent=1 // loop_exit
      _
    %v729 = vld [vmem:[#allocation3] sm:$0xff]
    %v730 = vld [vmem:[#allocation3 + $0x8] sm:$0xff]
    %v731 = vpack.c.bf16 %v730, %v729
    %s732 = scalar_lea.vmem %s7, 96
    %v733 = vld [vmem:[%s732] sm:$0xf]
    %v734 = vld [vmem:[%s732 + $0x4] sm:$0xf]
    %v735 = vld [vmem:[%s732 + $0x8] sm:$0xf]
    %v736 = vld [vmem:[%s732 + $0xc] sm:$0xf]
    %v737 = vld [vmem:[%s732 + $0x10] sm:$0xf]
    %v738 = vld [vmem:[%s732 + $0x14] sm:$0xf]
    %v739 = vld [vmem:[%s732 + $0x18] sm:$0xf]
    %v740 = vld [vmem:[%s732 + $0x1c] sm:$0xf]
    %v741 = vld [vmem:[%s732 + $0x20] sm:$0xf]
    %v742 = vld [vmem:[%s732 + $0x24] sm:$0xf]
    %v743 = vld [vmem:[%s732 + $0x28] sm:$0xf]
    %v744 = vld [vmem:[%s732 + $0x2c] sm:$0xf]
    %s745 = scalar_lea.vmem %s8, 2
    %v746 = vld [vmem:[%s745] sm:$0x1]
    %v748 = vlaneseq
    %v749 = vshrl.u32 %v748, 7
    %v750 = vsub.s32 0, %v749
    %v751 = vrot.slane %v746, %v750
    %v765 = vunpack.c.l.b16 %v733
    %v766 = vunpack.c.l.b16 %v734
    %v767 = vunpack.c.l.b16 %v735
    %v768 = vunpack.c.l.b16 %v736
    %v769 = vunpack.c.l.b16 %v737
    %v770 = vunpack.c.l.b16 %v738
    %v771 = vunpack.c.l.b16 %v739
    %v772 = vunpack.c.l.b16 %v740
    %v773 = vunpack.c.l.b16 %v741
    %v774 = vunpack.c.l.b16 %v742
    %v775 = vunpack.c.l.b16 %v743
    %v776 = vunpack.c.l.b16 %v744
    %v777 = vpack.c.b16 %v766, %v765
    %v778 = vpack.c.b16 %v768, %v767
    %v779 = vpack.c.b16 %v770, %v769
    %v780 = vpack.c.b16 %v772, %v771
    %v781 = vpack.c.b16 %v774, %v773
    %v782 = vpack.c.b16 %v776, %v775
    %v790 = vsel %vm221, %v731, 0
    %792 = vmatprep.subr.bf16.mxu0 0
    %793 = vmatpush1.bf16.msra.mxu0 %v777
    %794 = vmatprep.subr.bf16.mxu0 0
    %795 = vmatpush1.bf16.msra.mxu0 %v778
    %796 = vmatprep.subr.bf16.mxu0 0
    %797 = vmatpush1.bf16.msra.mxu0 %v779
    %798 = vmatprep.subr.bf16.mxu0 0
    %799 = vmatpush1.bf16.msra.mxu0 %v780
    %800 = vmatprep.subr.bf16.mxu0 0
    %801 = vmatpush1.bf16.msra.mxu0 %v781
    %802 = vmatprep.subr.bf16.mxu0 0
    %803 = vmatpush1.bf16.msra.mxu0 %v782
    %804 = vmatprep.subr.bf16.mxu0 0
    %805 = vmatpush1.bf16.msra.mxu0 0
    %806 = vmatprep.subr.bf16.mxu0 0
    %807 = vmatpush1.bf16.msra.mxu0 0
    %808 = vmatprep.subr.bf16.mxu0 0
    %809 = vmatpush1.bf16.msra.mxu0 0
    %810 = vmatprep.subr.bf16.mxu0 0
    %811 = vmatpush1.bf16.msra.mxu0 0
    %812 = vmatprep.subr.bf16.mxu0 0
    %813 = vmatpush1.bf16.msra.mxu0 0
    %814 = vmatprep.subr.bf16.mxu0 0
    %815 = vmatpush1.bf16.msra.mxu0 0
    %816 = vmatprep.subr.bf16.mxu0 0
    %817 = vmatpush1.bf16.msra.mxu0 0
    %818 = vmatprep.subr.bf16.mxu0 0
    %819 = vmatpush1.bf16.msra.mxu0 0
    %820 = vmatprep.subr.bf16.mxu0 0
    %821 = vmatpush1.bf16.msra.mxu0 0
    %822 = vmatprep.subr.bf16.mxu0 0
    %823 = vmatpush1.bf16.msra.mxu0 0
    %824 = vmatprep.mubr.bf16.mxu0 0
    %825 = vmatmul.mubr.bf16.gmra.mrb[0].mxu0 %v790
    %v826 = vpop.f32.mrb[0].mxu0
    %v827 = vadd.f32 %v751, %v826
    %v828 = vpop.f32.mrb[0].mxu0
    %v829 = vpop.f32.mrb[0].mxu0
    %v830 = vadd.f32 %v751, %v829
    %v831 = vpop.f32.mrb[0].mxu0
    %832 = vdwg.mxu0
    %v833 = vld [vmem:[#allocation2] sm:$0xff]
    %v834 = vld [vmem:[#allocation2 + $0x8] sm:$0xff]
    %v835 = vadd.f32 %v833, %v827
    %v836 = vadd.f32 %v834, %v830
    %v837 = vpack.c.bf16 %v836, %v835
    %s838 = scalar_lea.vmem %s9, 32
    %v839 = vld [vmem:[%s838] sm:$0xf]
    %v840 = vld [vmem:[%s838 + $0x4] sm:$0xf]
    %v841 = vld [vmem:[%s838 + $0x8] sm:$0xf]
    %v842 = vld [vmem:[%s838 + $0xc] sm:$0xf]
    %s843 = scalar_lea.vmem %s10, 2
    %v844 = vld [vmem:[%s843] sm:$0x1]
    %v846 = vlaneseq
    %v847 = vshrl.u32 %v846, 7
    %v848 = vsub.s32 0, %v847
    %v849 = vrot.slane %v844, %v848
    %v855 = vunpack.c.l.b16 %v839
    %v856 = vunpack.c.l.b16 %v840
    %v857 = vunpack.c.l.b16 %v841
    %v858 = vunpack.c.l.b16 %v842
    %v859 = vpack.c.b16 %v856, %v855
    %v860 = vpack.c.b16 %v858, %v857
    %v864 = vsel %vm110, %v837, 0
    %866 = vmatprep.subr.bf16.mxu0 0
    %867 = vmatpush1.bf16.msra.mxu0 %v859
    %868 = vmatprep.subr.bf16.mxu0 0
    %869 = vmatpush1.bf16.msra.mxu0 %v860
    %870 = vmatprep.subr.bf16.mxu0 0
    %871 = vmatpush1.bf16.msra.mxu0 0
    %872 = vmatprep.subr.bf16.mxu0 0
    %873 = vmatpush1.bf16.msra.mxu0 0
    %874 = vmatprep.subr.bf16.mxu0 0
    %875 = vmatpush1.bf16.msra.mxu0 0
    %876 = vmatprep.subr.bf16.mxu0 0
    %877 = vmatpush1.bf16.msra.mxu0 0
    %878 = vmatprep.subr.bf16.mxu0 0
    %879 = vmatpush1.bf16.msra.mxu0 0
    %880 = vmatprep.subr.bf16.mxu0 0
    %881 = vmatpush1.bf16.msra.mxu0 0
    %882 = vmatprep.subr.bf16.mxu0 0
    %883 = vmatpush1.bf16.msra.mxu0 0
    %884 = vmatprep.subr.bf16.mxu0 0
    %885 = vmatpush1.bf16.msra.mxu0 0
    %886 = vmatprep.subr.bf16.mxu0 0
    %887 = vmatpush1.bf16.msra.mxu0 0
    %888 = vmatprep.subr.bf16.mxu0 0
    %889 = vmatpush1.bf16.msra.mxu0 0
    %890 = vmatprep.subr.bf16.mxu0 0
    %891 = vmatpush1.bf16.msra.mxu0 0
    %892 = vmatprep.subr.bf16.mxu0 0
    %893 = vmatpush1.bf16.msra.mxu0 0
    %894 = vmatprep.subr.bf16.mxu0 0
    %895 = vmatpush1.bf16.msra.mxu0 0
    %896 = vmatprep.subr.bf16.mxu0 0
    %897 = vmatpush1.bf16.msra.mxu0 0
    %898 = vmatprep.mubr.bf16.mxu0 0
    %899 = vmatmul.mubr.bf16.gmra.mrb[0].mxu0 %v864
    %v900 = vpop.f32.mrb[0].mxu0
    %v901 = vadd.f32 %v849, %v900
    %v902 = vpop.f32.mrb[0].mxu0
    %v903 = vpop.f32.mrb[0].mxu0
    %v904 = vadd.f32 %v849, %v903
    %v905 = vpop.f32.mrb[0].mxu0
    %906 = vdwg.mxu0
    %v907 = vadd.f32 %v901, %v626
    %v908 = vadd.f32 %v904, %v627
    %909 = vst.msk [vmem:[#allocation2] sm:$0xff] %vm110, %v907
    %910 = vst.msk [vmem:[#allocation2 + $0x8] sm:$0xff] %vm110, %v908
    %v911 = vld [vmem:[#allocation2] sm:$0xff]
    %v912 = vld [vmem:[#allocation2 + $0x8] sm:$0xff]
    %v913 = vld [vmem:[%s11] sm:$0x1]
    %v914 = vld [vmem:[%s12] sm:$0x1]
    %v915 = vsel %vm110, %v911, 0.0
    %916 = vadd.xlane.f32.xlu0 %v915
    %v917 = vpop.xlane.xlu0 %916
    %v918 = vsel %vm110, %v912, 0.0
    %919 = vadd.xlane.f32.xlu0 %v918
    %v920 = vpop.xlane.xlu0 %919
    %v921 = vmul.f32 %v917, %v352
    %v922 = vmul.f32 %v920, %v352
    %v923 = vsub.f32 %v911, %v921
    %v924 = vsub.f32 %v912, %v922
    %v925 = vmul.f32 %v923, %v923
    %v926 = vmul.f32 %v924, %v924
    %v927 = vsel %vm110, %v925, 0.0
    %928 = vadd.xlane.f32.xlu0 %v927
    %v929 = vpop.xlane.xlu0 %928
    %v930 = vsel %vm110, %v926, 0.0
    %931 = vadd.xlane.f32.xlu0 %v930
    %v932 = vpop.xlane.xlu0 %931
    %v933 = vmul.f32 %v929, %v352
    %v934 = vmul.f32 %v932, %v352
    %v935 = vadd.f32 %v933, 1e-05
    %v936 = vadd.f32 %v934, 1e-05
    %v937 = vrsqrt.pop %v935
    %v938 = vrsqrt.pop %v936
    %v939 = vmul.f32 %v923, %v937
    %v940 = vmul.f32 %v924, %v938
    %v942 = vlaneseq
    %v943 = vshrl.u32 %v942, 7
    %v944 = vsub.s32 0, %v943
    %v945 = vrot.slane %v913, %v944
    %v947 = vmul.f32 %v939, %v945
    %v948 = vmul.f32 %v940, %v945
    %v950 = vlaneseq
    %v951 = vshrl.u32 %v950, 7
    %v952 = vsub.s32 0, %v951
    %v953 = vrot.slane %v914, %v952
    %v955 = vadd.f32 %v947, %v953
    %v956 = vadd.f32 %v948, %v953
    %v957 = vmax.f32 %v955, 0.0
    %v958 = vmax.f32 %v956, 0.0
    %959 = vst.msk [vmem:[#allocation14] sm:$0xff] %vm110, %v957
    %960 = vst.msk [vmem:[#allocation14 + $0x8] sm:$0xff] %vm110, %v958
    loop: start=0, step=1, limit=2
    $region116: #{deeper_gcn_forward.1} parent=1 // loop_pre_header
      _
    $region117: #{deeper_gcn_forward.1} parent=1 // loop_header
      %s962 = sphi 0, %s966
      %p963 = scmp.ge.s32.totalorder %s962, 2
    $region118: #{deeper_gcn_forward.1} parent=1 // loop_header_branch
      %965 = sbr.rel (%p963) target = $region122
    $region119: #{deeper_gcn_forward.1} parent=1 // loop_body
      %s967 = sld [smem:[#allocation9 + %s962]]
      %s968 = sadd.s32 %s962, 1
      %s969 = sld [smem:[#allocation9 + %s968]]
      // While loop
      $region123: #{deeper_gcn_forward.1} parent=119 // loop_pre_header
        _
      $region124: #{deeper_gcn_forward.1} parent=119 // loop_header
        %s971 = sphi %s967, %s973
        %p972 = scmp.ge.s32.totalorder %s971, %s969
        %v976 = vphi -inf, %v980
        %v977 = vphi 0.0, %v981
      $region125: #{deeper_gcn_forward.1} parent=119 // loop_header_branch
        %975 = sbr.rel (%p972) target = $region129
      $region126: #{deeper_gcn_forward.1} parent=119 // loop_body
        %s978 = scalar_lea.vmem [#allocation14], %s971
        %v979 = vld [vmem:[%s978] sm:$0x1]
        %v980 = vmax.f32 %v976, %v979
        %v981 = vadd.f32 %v977, %v979
      $region127: #{deeper_gcn_forward.1} parent=119 // loop_footer
        %s973 = sadd.s32 %s971, 1
      $region128: #{deeper_gcn_forward.1} parent=119 // loop_footer_branch
        %970 = sbr.rel target = $region124
      $region129: #{deeper_gcn_forward.1} parent=119 // loop_exit
        _
      %s982 = sld [smem:[#allocation12 + %s962]]
      %p983 = scmp.gt.s32.totalorder %s969, %s967
      %s984 = scalar_select %p983, 1, 0
      %v985 = vstv %s984
      %vm986 = vcmp.eq.s32.totalorder %v985, 1
      %v987 = vsel %vm986, %v976, 0.0
      %v988 = vstv %s982
      %v989 = vmul.f32 %v977, %v988
      %991 = vrot.lane.b32.xlu0 %v989, 32
      %v992 = vpop.permute.xlu0 %991
      %v994 = vsel %vm110, %v987, %v992
      %s995 = scalar_lea.vmem [#allocation13], %s962
      %vm996 = vcmask 516096
      %997 = vst.msk [vmem:[%s995] sm:$0x1] %vm996, %v994
    $region120: #{deeper_gcn_forward.1} parent=1 // loop_footer
      %s966 = sadd.s32 1, %s962
    $region121: #{deeper_gcn_forward.1} parent=1 // loop_footer_branch
      %961 = sbr.rel target = $region117
    $region122: #{deeper_gcn_forward.1} parent=1 // loop_exit
      _
    // Predicated region
    $region130: #{deeper_gcn_forward.1} parent=1 // pred_check
      _
    $region131: #{deeper_gcn_forward.1} parent=1 // pred_check_branch
      %999 = sbr.rel (0) target = $region133
    $region132: #{deeper_gcn_forward.1} parent=1 // pred_region
      %s1001 = ssub.s32 32, 32
      %1002 = vsyncadd [#allocation5], %s1001
      %s1004 = sshll.u32 [#allocation13], 4
      %s1005 = int_to_ptr.vmem [resolvable:$true] %s1004
      %1007 = dma.vmem_to_hbm [thread:$0]  %s1005, 32, %s13, [#allocation5]
    $region133: #{deeper_gcn_forward.1} parent=1 // pred_fallthru
      _
    // Predicated region
    $region134: #{deeper_gcn_forward.1} parent=1 // pred_check
      _
    $region135: #{deeper_gcn_forward.1} parent=1 // pred_check_branch
      %1009 = sbr.rel (0) target = $region137
    $region136: #{deeper_gcn_forward.1} parent=1 // pred_region
      %s1011 = ssub.s32 256, 256
      %1012 = vsyncadd [#allocation15], %s1011
      %s1013 = sshll.u32 [#allocation14], 4
      %s1014 = int_to_ptr.vmem [resolvable:$true] %s1013
      %1019 = dma.vmem_to_hbm [thread:$0]  %s1014, 256, %s14, [#allocation15], 128, 128, 8
    $region137: #{deeper_gcn_forward.1} parent=1 // pred_fallthru
      _
    // Predicated region
    $region138: #{deeper_gcn_forward.1} parent=1 // pred_check
      _
    $region139: #{deeper_gcn_forward.1} parent=1 // pred_check_branch
      %1021 = sbr.rel (0) target = $region141
    $region140: #{deeper_gcn_forward.1} parent=1 // pred_region
      %1022 = dma.done [#allocation5], 32
    $region141: #{deeper_gcn_forward.1} parent=1 // pred_fallthru
      _
    // Predicated region
    $region142: #{deeper_gcn_forward.1} parent=1 // pred_check
      _
    $region143: #{deeper_gcn_forward.1} parent=1 // pred_check_branch
      %1024 = sbr.rel (0) target = $region145
    $region144: #{deeper_gcn_forward.1} parent=1 // pred_region
      %1025 = dma.done [#allocation15], 256
    $region145: #{deeper_gcn_forward.1} parent=1 // pred_fallthru
      _
    %1026 = vsyncpa [#allocation5], 1
    %1027 = vsyncpa [#allocation15], 1
    %1028 = vsyncpa [#allocation6], 1
    %1029 = vsyncpa [#allocation8], 1
    %1030 = vsyncpa [#allocation11], 1

</llo_original>
